<compile_context>
chip_gen: v6e
topology: v6e:2x2x1
jax: 0.10.0
libtpu: 0.0.40
codegen_flags: <defaults>
</compile_context>

<pallas_src>
import jax
import jax.numpy as jnp
from jax.experimental import pallas as pl
from jax.experimental.pallas import tpu as pltpu

# ---------------- model hyper-parameters (small, consistent with the module) ------------
N_NODES = 32          # number of graph nodes (rows of h / adj)
INPUT_DIM = 8         # input feature dim
HIDDEN_DIM = 32       # hidden dim at all layers
ATT_OUT = 36          # GraphAttentionLayer out_features (hard-coded in the module)
NUM_LAYERS = 3        # GraphCNN num_layers  -> num_layers - 1 = 2 GNN layers
N_LAYERS = NUM_LAYERS - 1
LEAKY_ALPHA = 0.01
BN_EPS = 1e-5
N_GRAPHS = 2          # rows of graph_pool
FD = 128              # padded (lane-dense) feature width used inside the kernel


# ---------------------------------- fused Pallas kernel ----------------------------------
def graphcnn_fused_kernel(x_ref, adj_ref, gp_ref,
                          W_ref, a1_ref, a2_ref,
                          w1_ref, b1_ref, w2_ref, b2_ref,
                          eps_ref,
                          h_out_ref, pooled_out_ref):
    """Full GraphCNN forward: L fused GNN layers, then graph pooling. All in VMEM."""
    h = x_ref[...]                                                       # [N, FD]
    adj = adj_ref[...]                                                   # [N, N]

    for layer in range(N_LAYERS):                                        # unrolled (L=2)
        eps = eps_ref[layer]                                             # scalar SMEM read

        # --- GraphAttentionLayer: e[i,j] = leakyrelu(Wh_i.a1 + Wh_j.a2), row softmax ---
        Wh = jnp.dot(h, W_ref[layer], preferred_element_type=jnp.float32)   # [N, FD]
        f1 = jnp.dot(Wh, a1_ref[layer], preferred_element_type=jnp.float32)  # [N, 1] (MXU)
        # [1, N] directly via dot_general -> no [N,1]->[1,N] transpose on the XLU.
        f2 = jax.lax.dot_general(a2_ref[layer], Wh, (((1,), (1,)), ((), ())),
                                 preferred_element_type=jnp.float32)         # [1, N]
        e = f1 + f2                                                          # [N, N]
        e = jnp.where(e > 0, e, LEAKY_ALPHA * e)                             # LeakyReLU
        e = e - jnp.max(e, axis=1, keepdims=True)                            # stable softmax
        p = jnp.exp(e)
        attention = p * pl.reciprocal(jnp.sum(p, axis=1, keepdims=True), approx=True)

        # --- neighbor pooling (sum): pooled = (Adj * attention) @ h + (1+eps)*h ---
        pooled = jnp.dot(adj * attention, h, preferred_element_type=jnp.float32)
        pooled = pooled + (1.0 + eps) * h

        # --- MLP: Linear -> BatchNorm(batch stats) -> ReLU -> Linear ---
        z1 = jnp.dot(pooled, w1_ref[layer],
                     preferred_element_type=jnp.float32) + b1_ref[layer]
        mu1 = jnp.mean(z1, axis=0, keepdims=True)
        var1 = jnp.mean((z1 - mu1) ** 2, axis=0, keepdims=True)
        z1 = jnp.maximum((z1 - mu1) * jax.lax.rsqrt(var1 + BN_EPS), 0.0)
        z2 = jnp.dot(z1, w2_ref[layer],
                     preferred_element_type=jnp.float32) + b2_ref[layer]

        # --- outer BatchNorm1d + ReLU ---
        mu2 = jnp.mean(z2, axis=0, keepdims=True)
        var2 = jnp.mean((z2 - mu2) ** 2, axis=0, keepdims=True)
        h = jnp.maximum((z2 - mu2) * jax.lax.rsqrt(var2 + BN_EPS), 0.0)

    h_out_ref[...] = h                                                   # [N, FD]
    # pooled_h = graph_pool @ h  (dense version of torch.sparse.mm)
    pooled_out_ref[...] = jnp.dot(gp_ref[...], h, preferred_element_type=jnp.float32)


# ---------------------------------- wrapper -----------------------------------------------
_VMEM = pl.BlockSpec(memory_space=pltpu.MemorySpace.VMEM)
_SMEM = pl.BlockSpec(memory_space=pltpu.MemorySpace.SMEM)


@jax.jit
def graphcnn_forward(x, graph_pool, adj, packed):
    n = x.shape[0]
    # zero-pad input features to the lane-dense width used inside the kernel
    x_pad = jnp.zeros((n, FD), jnp.float32).at[:, :x.shape[1]].set(x)
    h_pad, pooled_pad = pl.pallas_call(
        graphcnn_fused_kernel,
        out_shape=(jax.ShapeDtypeStruct((n, FD), jnp.float32),
                   jax.ShapeDtypeStruct((graph_pool.shape[0], FD), jnp.float32)),
        in_specs=[_VMEM] * 10 + [_SMEM],
        out_specs=(_VMEM, _VMEM),
    )(x_pad, adj, graph_pool,
      packed["W"], packed["a1"], packed["a2"],
      packed["w1"], packed["b1"], packed["w2"], packed["b2"],
      packed["eps"])
    return pooled_pad[:, :HIDDEN_DIM], h_pad[:, :HIDDEN_DIM]


# ---------------------------------- parameter init ----------------------------------------
def xavier_uniform(key, shape, gain=1.414):
    fan_in, fan_out = shape[0], shape[1]
    bound = gain * jnp.sqrt(6.0 / (fan_in + fan_out))
    return jax.random.uniform(key, shape, jnp.float32, -bound, bound)


def linear_init(key, fan_in, fan_out):
    kw, kb = jax.random.split(key)
    bound = 1.0 / jnp.sqrt(fan_in)
    w = jax.random.uniform(kw, (fan_in, fan_out), jnp.float32, -bound, bound)
    b = jax.random.uniform(kb, (fan_out,), jnp.float32, -bound, bound)
    return w, b


def init_params(key):
    params = []
    for layer in range(N_LAYERS):
        d_in = INPUT_DIM if layer == 0 else HIDDEN_DIM
        key, k1, k2, k3, k4 = jax.random.split(key, 5)
        W = xavier_uniform(k1, (d_in, ATT_OUT))
        a = xavier_uniform(k2, (2 * ATT_OUT, 1))
        w1, b1 = linear_init(k3, d_in, HIDDEN_DIM)
        w2, b2 = linear_init(k4, HIDDEN_DIM, HIDDEN_DIM)
        params.append(dict(W=W, a1=a[:ATT_OUT, 0], a2=a[ATT_OUT:, 0],
                           w1=w1, b1=b1, w2=w2, b2=b2,
                           eps=jnp.float32(0.0)))          # learn_eps init = 0
    return params


def pack_params(params):
    """Zero-pad every layer's weights to uniform FD x FD shapes and stack over layers."""
    L = len(params)
    pk = dict(
        W=jnp.zeros((L, FD, FD), jnp.float32),
        a1=jnp.zeros((L, FD, 1), jnp.float32),
        a2=jnp.zeros((L, 1, FD), jnp.float32),
        w1=jnp.zeros((L, FD, FD), jnp.float32),
        b1=jnp.zeros((L, 1, FD), jnp.float32),
        w2=jnp.zeros((L, FD, FD), jnp.float32),
        b2=jnp.zeros((L, 1, FD), jnp.float32),
        eps=jnp.zeros((L,), jnp.float32),
    )
    for l, p in enumerate(params):
        d_in = p["W"].shape[0]
        pk["W"] = pk["W"].at[l, :d_in, :ATT_OUT].set(p["W"])
        pk["a1"] = pk["a1"].at[l, :ATT_OUT, 0].set(p["a1"])
        pk["a2"] = pk["a2"].at[l, 0, :ATT_OUT].set(p["a2"])
        pk["w1"] = pk["w1"].at[l, :d_in, :HIDDEN_DIM].set(p["w1"])
        pk["b1"] = pk["b1"].at[l, 0, :HIDDEN_DIM].set(p["b1"])
        pk["w2"] = pk["w2"].at[l, :HIDDEN_DIM, :HIDDEN_DIM].set(p["w2"])
        pk["b2"] = pk["b2"].at[l, 0, :HIDDEN_DIM].set(p["b2"])
        pk["eps"] = pk["eps"].at[l].set(p["eps"])
    return pk


# ---------------------------------- pure-JAX reference ------------------------------------
def gnn_layer_ref(h, adj, p):
    Wh = h @ p["W"]
    f1 = jnp.sum(Wh * p["a1"][None, :], axis=1, keepdims=True)
    f2 = jnp.sum(Wh * p["a2"][None, :], axis=1, keepdims=True)
    e = f1 + f2.T
    e = jnp.where(e > 0, e, LEAKY_ALPHA * e)
    attention = jax.nn.softmax(e, axis=1)
    pooled = (adj * attention) @ h + (1.0 + p["eps"]) * h
    z1 = pooled @ p["w1"] + p["b1"][None, :]
    z1 = (z1 - z1.mean(0, keepdims=True)) * jax.lax.rsqrt(z1.var(0, keepdims=True) + BN_EPS)
    z1 = jnp.maximum(z1, 0.0)
    z2 = z1 @ p["w2"] + p["b2"][None, :]
    z2 = (z2 - z2.mean(0, keepdims=True)) * jax.lax.rsqrt(z2.var(0, keepdims=True) + BN_EPS)
    return jnp.maximum(z2, 0.0)


def forward_ref(x, graph_pool, adj, all_params):
    h = x
    for p in all_params:
        h = gnn_layer_ref(h, adj, p)
    return graph_pool @ h, h


# ---------------------------------- main ---------------------------------------------------
if __name__ == "__main__":
    key = jax.random.PRNGKey(0)
    key, kx, ka = jax.random.split(key, 3)

    x = jax.random.normal(kx, (N_NODES, INPUT_DIM), jnp.float32)
    # deterministic adjacency with self loops
    adj = (jax.random.uniform(ka, (N_NODES, N_NODES)) < 0.3).astype(jnp.float32)
    adj = jnp.maximum(adj, jnp.eye(N_NODES, dtype=jnp.float32))
    # graph_pool: block-diagonal mean pooling over 2 graphs of 16 nodes each
    per_graph = N_NODES // N_GRAPHS
    graph_pool = jnp.zeros((N_GRAPHS, N_NODES), jnp.float32)
    for g in range(N_GRAPHS):
        graph_pool = graph_pool.at[g, g * per_graph:(g + 1) * per_graph].set(1.0 / per_graph)

    all_params = init_params(key)
    packed = pack_params(all_params)

    pooled_h, h_nodes = graphcnn_forward(x, graph_pool, adj, packed)
    jax.block_until_ready((pooled_h, h_nodes))

    pooled_ref, h_ref = forward_ref(x, graph_pool, adj, all_params)
    assert pooled_h.shape == (N_GRAPHS, HIDDEN_DIM)
    assert h_nodes.shape == (N_NODES, HIDDEN_DIM)
    assert jnp.all(jnp.isfinite(pooled_h)) and jnp.all(jnp.isfinite(h_nodes))
    assert jnp.allclose(h_nodes, h_ref, rtol=1e-2, atol=1e-2)
    assert jnp.allclose(pooled_h, pooled_ref, rtol=1e-2, atol=1e-2)

    print("KERNEL_OK")
</pallas_src>

<mosaic_0001>
module attributes {stable_mosaic.version = 11 : i64} {
  func.func @graphcnn_fused_kernel(%arg0: memref<32x128xf32, #tpu.memory_space<vmem>>, %arg1: memref<32x32xf32, #tpu.memory_space<vmem>>, %arg2: memref<2x32xf32, #tpu.memory_space<vmem>>, %arg3: memref<2x128x128xf32, #tpu.memory_space<vmem>>, %arg4: memref<2x128x1xf32, #tpu.memory_space<vmem>>, %arg5: memref<2x1x128xf32, #tpu.memory_space<vmem>>, %arg6: memref<2x128x128xf32, #tpu.memory_space<vmem>>, %arg7: memref<2x1x128xf32, #tpu.memory_space<vmem>>, %arg8: memref<2x128x128xf32, #tpu.memory_space<vmem>>, %arg9: memref<2x1x128xf32, #tpu.memory_space<vmem>>, %arg10: memref<2xf32, #tpu.memory_space<smem>>, %arg11: memref<32x128xf32, #tpu.memory_space<vmem>>, %arg12: memref<2x128xf32, #tpu.memory_space<vmem>>) attributes {dimension_semantics = [], scalar_prefetch = 0 : i64, scratch_operands = 0 : i64, tpu.core_type = #tpu.core_type<tc>} {
    %c0 = arith.constant 0 : index
    %c0_0 = arith.constant 0 : index
    %0 = vector.load %arg0[%c0, %c0_0] : memref<32x128xf32, #tpu.memory_space<vmem>>, vector<32x128xf32>
    %c0_1 = arith.constant 0 : index
    %c0_2 = arith.constant 0 : index
    %1 = vector.load %arg1[%c0_1, %c0_2] : memref<32x32xf32, #tpu.memory_space<vmem>>, vector<32x32xf32>
    %c0_3 = arith.constant 0 : index
    %2 = memref.load %arg10[%c0_3] : memref<2xf32, #tpu.memory_space<smem>>
    %c0_4 = arith.constant 0 : index
    %c0_5 = arith.constant 0 : index
    %c0_6 = arith.constant 0 : index
    %3 = vector.load %arg3[%c0_4, %c0_5, %c0_6] : memref<2x128x128xf32, #tpu.memory_space<vmem>>, vector<1x128x128xf32>
    %4 = vector.shape_cast %3 : vector<1x128x128xf32> to vector<128x128xf32>
    %cst = arith.constant dense<0.000000e+00> : vector<32x128xf32>
    %5 = tpu.matmul %0, %4, %cst {dimension_numbers = #tpu.dot_dimension_numbers<[1], [0], [0], [1], [0, 0, 1, 1], [], []>} : vector<32x128xf32>, vector<128x128xf32>, vector<32x128xf32> -> vector<32x128xf32>
    %c0_7 = arith.constant 0 : index
    %c0_8 = arith.constant 0 : index
    %c0_9 = arith.constant 0 : index
    %6 = vector.load %arg4[%c0_7, %c0_8, %c0_9] : memref<2x128x1xf32, #tpu.memory_space<vmem>>, vector<1x128x1xf32>
    %7 = vector.shape_cast %6 : vector<1x128x1xf32> to vector<128x1xf32>
    %cst_10 = arith.constant dense<0.000000e+00> : vector<32x1xf32>
    %8 = tpu.matmul %5, %7, %cst_10 {dimension_numbers = #tpu.dot_dimension_numbers<[1], [0], [0], [1], [0, 0, 1, 1], [], []>} : vector<32x128xf32>, vector<128x1xf32>, vector<32x1xf32> -> vector<32x1xf32>
    %c0_11 = arith.constant 0 : index
    %c0_12 = arith.constant 0 : index
    %c0_13 = arith.constant 0 : index
    %9 = vector.load %arg5[%c0_11, %c0_12, %c0_13] : memref<2x1x128xf32, #tpu.memory_space<vmem>>, vector<1x1x128xf32>
    %10 = vector.shape_cast %9 : vector<1x1x128xf32> to vector<1x128xf32>
    %cst_14 = arith.constant dense<0.000000e+00> : vector<1x32xf32>
    %11 = tpu.matmul %10, %5, %cst_14 {dimension_numbers = #tpu.dot_dimension_numbers<[1], [1], [0], [0], [0, 0, 1, 0], [], []>} : vector<1x128xf32>, vector<32x128xf32>, vector<1x32xf32> -> vector<1x32xf32>
    %12 = vector.broadcast %8 : vector<32x1xf32> to vector<32x32xf32>
    %13 = vector.broadcast %11 : vector<1x32xf32> to vector<32x32xf32>
    %14 = arith.addf %12, %13 : vector<32x32xf32>
    %cst_15 = arith.constant 0.000000e+00 : f32
    %15 = vector.broadcast %cst_15 : f32 to vector<32x32xf32>
    %16 = arith.cmpf ogt, %14, %15 : vector<32x32xf32>
    %cst_16 = arith.constant 0.00999999977 : f32
    %17 = vector.broadcast %cst_16 : f32 to vector<32x32xf32>
    %18 = arith.mulf %17, %14 : vector<32x32xf32>
    %19 = arith.select %16, %14, %18 : vector<32x32xi1>, vector<32x32xf32>
    %cst_17 = arith.constant dense<0xFF800000> : vector<32xf32>
    %20 = vector.multi_reduction <maximumf>, %19, %cst_17 [1] : vector<32x32xf32> to vector<32xf32>
    %21 = vector.shape_cast %20 : vector<32xf32> to vector<32x1xf32>
    %22 = vector.broadcast %21 : vector<32x1xf32> to vector<32x32xf32>
    %23 = arith.subf %19, %22 : vector<32x32xf32>
    %24 = math.exp %23 : vector<32x32xf32>
    %cst_18 = arith.constant dense<0.000000e+00> : vector<32xf32>
    %25 = vector.multi_reduction <add>, %24, %cst_18 [1] : vector<32x32xf32> to vector<32xf32>
    %26 = vector.shape_cast %25 : vector<32xf32> to vector<32x1xf32>
    %27 = tpu.reciprocal %26 {approx = true} : vector<32x1xf32> -> vector<32x1xf32>
    %28 = vector.broadcast %27 : vector<32x1xf32> to vector<32x32xf32>
    %29 = arith.mulf %24, %28 : vector<32x32xf32>
    %30 = arith.mulf %1, %29 : vector<32x32xf32>
    %cst_19 = arith.constant dense<0.000000e+00> : vector<32x128xf32>
    %31 = tpu.matmul %30, %0, %cst_19 {dimension_numbers = #tpu.dot_dimension_numbers<[1], [0], [0], [1], [0, 0, 1, 1], [], []>} : vector<32x32xf32>, vector<32x128xf32>, vector<32x128xf32> -> vector<32x128xf32>
    %cst_20 = arith.constant 1.000000e+00 : f32
    %32 = arith.addf %cst_20, %2 : f32
    %33 = vector.broadcast %32 : f32 to vector<32x128xf32>
    %34 = arith.mulf %33, %0 : vector<32x128xf32>
    %35 = arith.addf %31, %34 : vector<32x128xf32>
    %c0_21 = arith.constant 0 : index
    %c0_22 = arith.constant 0 : index
    %c0_23 = arith.constant 0 : index
    %36 = vector.load %arg6[%c0_21, %c0_22, %c0_23] : memref<2x128x128xf32, #tpu.memory_space<vmem>>, vector<1x128x128xf32>
    %37 = vector.shape_cast %36 : vector<1x128x128xf32> to vector<128x128xf32>
    %cst_24 = arith.constant dense<0.000000e+00> : vector<32x128xf32>
    %38 = tpu.matmul %35, %37, %cst_24 {dimension_numbers = #tpu.dot_dimension_numbers<[1], [0], [0], [1], [0, 0, 1, 1], [], []>} : vector<32x128xf32>, vector<128x128xf32>, vector<32x128xf32> -> vector<32x128xf32>
    %c0_25 = arith.constant 0 : index
    %c0_26 = arith.constant 0 : index
    %c0_27 = arith.constant 0 : index
    %39 = vector.load %arg7[%c0_25, %c0_26, %c0_27] : memref<2x1x128xf32, #tpu.memory_space<vmem>>, vector<1x1x128xf32>
    %40 = vector.shape_cast %39 : vector<1x1x128xf32> to vector<1x128xf32>
    %41 = vector.broadcast %40 : vector<1x128xf32> to vector<32x128xf32>
    %42 = arith.addf %38, %41 : vector<32x128xf32>
    %cst_28 = arith.constant dense<0.000000e+00> : vector<128xf32>
    %43 = vector.multi_reduction <add>, %42, %cst_28 [0] : vector<32x128xf32> to vector<128xf32>
    %44 = vector.shape_cast %43 : vector<128xf32> to vector<1x128xf32>
    %cst_29 = arith.constant 3.200000e+01 : f32
    %45 = vector.broadcast %cst_29 : f32 to vector<1x128xf32>
    %46 = arith.divf %44, %45 : vector<1x128xf32>
    %47 = vector.broadcast %46 : vector<1x128xf32> to vector<32x128xf32>
    %48 = arith.subf %42, %47 : vector<32x128xf32>
    %49 = arith.mulf %48, %48 : vector<32x128xf32>
    %cst_30 = arith.constant dense<0.000000e+00> : vector<128xf32>
    %50 = vector.multi_reduction <add>, %49, %cst_30 [0] : vector<32x128xf32> to vector<128xf32>
    %51 = vector.shape_cast %50 : vector<128xf32> to vector<1x128xf32>
    %cst_31 = arith.constant 3.200000e+01 : f32
    %52 = vector.broadcast %cst_31 : f32 to vector<1x128xf32>
    %53 = arith.divf %51, %52 : vector<1x128xf32>
    %54 = vector.broadcast %46 : vector<1x128xf32> to vector<32x128xf32>
    %55 = arith.subf %42, %54 : vector<32x128xf32>
    %cst_32 = arith.constant 9.99999974E-6 : f32
    %56 = vector.broadcast %cst_32 : f32 to vector<1x128xf32>
    %57 = arith.addf %53, %56 : vector<1x128xf32>
    %58 = math.rsqrt %57 : vector<1x128xf32>
    %59 = vector.broadcast %58 : vector<1x128xf32> to vector<32x128xf32>
    %60 = arith.mulf %55, %59 : vector<32x128xf32>
    %cst_33 = arith.constant 0.000000e+00 : f32
    %61 = vector.broadcast %cst_33 : f32 to vector<32x128xf32>
    %62 = arith.maximumf %60, %61 : vector<32x128xf32>
    %c0_34 = arith.constant 0 : index
    %c0_35 = arith.constant 0 : index
    %c0_36 = arith.constant 0 : index
    %63 = vector.load %arg8[%c0_34, %c0_35, %c0_36] : memref<2x128x128xf32, #tpu.memory_space<vmem>>, vector<1x128x128xf32>
    %64 = vector.shape_cast %63 : vector<1x128x128xf32> to vector<128x128xf32>
    %cst_37 = arith.constant dense<0.000000e+00> : vector<32x128xf32>
    %65 = tpu.matmul %62, %64, %cst_37 {dimension_numbers = #tpu.dot_dimension_numbers<[1], [0], [0], [1], [0, 0, 1, 1], [], []>} : vector<32x128xf32>, vector<128x128xf32>, vector<32x128xf32> -> vector<32x128xf32>
    %c0_38 = arith.constant 0 : index
    %c0_39 = arith.constant 0 : index
    %c0_40 = arith.constant 0 : index
    %66 = vector.load %arg9[%c0_38, %c0_39, %c0_40] : memref<2x1x128xf32, #tpu.memory_space<vmem>>, vector<1x1x128xf32>
    %67 = vector.shape_cast %66 : vector<1x1x128xf32> to vector<1x128xf32>
    %68 = vector.broadcast %67 : vector<1x128xf32> to vector<32x128xf32>
    %69 = arith.addf %65, %68 : vector<32x128xf32>
    %cst_41 = arith.constant dense<0.000000e+00> : vector<128xf32>
    %70 = vector.multi_reduction <add>, %69, %cst_41 [0] : vector<32x128xf32> to vector<128xf32>
    %71 = vector.shape_cast %70 : vector<128xf32> to vector<1x128xf32>
    %cst_42 = arith.constant 3.200000e+01 : f32
    %72 = vector.broadcast %cst_42 : f32 to vector<1x128xf32>
    %73 = arith.divf %71, %72 : vector<1x128xf32>
    %74 = vector.broadcast %73 : vector<1x128xf32> to vector<32x128xf32>
    %75 = arith.subf %69, %74 : vector<32x128xf32>
    %76 = arith.mulf %75, %75 : vector<32x128xf32>
    %cst_43 = arith.constant dense<0.000000e+00> : vector<128xf32>
    %77 = vector.multi_reduction <add>, %76, %cst_43 [0] : vector<32x128xf32> to vector<128xf32>
    %78 = vector.shape_cast %77 : vector<128xf32> to vector<1x128xf32>
    %cst_44 = arith.constant 3.200000e+01 : f32
    %79 = vector.broadcast %cst_44 : f32 to vector<1x128xf32>
    %80 = arith.divf %78, %79 : vector<1x128xf32>
    %81 = vector.broadcast %73 : vector<1x128xf32> to vector<32x128xf32>
    %82 = arith.subf %69, %81 : vector<32x128xf32>
    %cst_45 = arith.constant 9.99999974E-6 : f32
    %83 = vector.broadcast %cst_45 : f32 to vector<1x128xf32>
    %84 = arith.addf %80, %83 : vector<1x128xf32>
    %85 = math.rsqrt %84 : vector<1x128xf32>
    %86 = vector.broadcast %85 : vector<1x128xf32> to vector<32x128xf32>
    %87 = arith.mulf %82, %86 : vector<32x128xf32>
    %cst_46 = arith.constant 0.000000e+00 : f32
    %88 = vector.broadcast %cst_46 : f32 to vector<32x128xf32>
    %89 = arith.maximumf %87, %88 : vector<32x128xf32>
    %c1 = arith.constant 1 : index
    %90 = memref.load %arg10[%c1] : memref<2xf32, #tpu.memory_space<smem>>
    %c1_47 = arith.constant 1 : index
    %c0_48 = arith.constant 0 : index
    %c0_49 = arith.constant 0 : index
    %91 = vector.load %arg3[%c1_47, %c0_48, %c0_49] : memref<2x128x128xf32, #tpu.memory_space<vmem>>, vector<1x128x128xf32>
    %92 = vector.shape_cast %91 : vector<1x128x128xf32> to vector<128x128xf32>
    %cst_50 = arith.constant dense<0.000000e+00> : vector<32x128xf32>
    %93 = tpu.matmul %89, %92, %cst_50 {dimension_numbers = #tpu.dot_dimension_numbers<[1], [0], [0], [1], [0, 0, 1, 1], [], []>} : vector<32x128xf32>, vector<128x128xf32>, vector<32x128xf32> -> vector<32x128xf32>
    %c1_51 = arith.constant 1 : index
    %c0_52 = arith.constant 0 : index
    %c0_53 = arith.constant 0 : index
    %94 = vector.load %arg4[%c1_51, %c0_52, %c0_53] : memref<2x128x1xf32, #tpu.memory_space<vmem>>, vector<1x128x1xf32>
    %95 = vector.shape_cast %94 : vector<1x128x1xf32> to vector<128x1xf32>
    %cst_54 = arith.constant dense<0.000000e+00> : vector<32x1xf32>
    %96 = tpu.matmul %93, %95, %cst_54 {dimension_numbers = #tpu.dot_dimension_numbers<[1], [0], [0], [1], [0, 0, 1, 1], [], []>} : vector<32x128xf32>, vector<128x1xf32>, vector<32x1xf32> -> vector<32x1xf32>
    %c1_55 = arith.constant 1 : index
    %c0_56 = arith.constant 0 : index
    %c0_57 = arith.constant 0 : index
    %97 = vector.load %arg5[%c1_55, %c0_56, %c0_57] : memref<2x1x128xf32, #tpu.memory_space<vmem>>, vector<1x1x128xf32>
    %98 = vector.shape_cast %97 : vector<1x1x128xf32> to vector<1x128xf32>
    %cst_58 = arith.constant dense<0.000000e+00> : vector<1x32xf32>
    %99 = tpu.matmul %98, %93, %cst_58 {dimension_numbers = #tpu.dot_dimension_numbers<[1], [1], [0], [0], [0, 0, 1, 0], [], []>} : vector<1x128xf32>, vector<32x128xf32>, vector<1x32xf32> -> vector<1x32xf32>
    %100 = vector.broadcast %96 : vector<32x1xf32> to vector<32x32xf32>
    %101 = vector.broadcast %99 : vector<1x32xf32> to vector<32x32xf32>
    %102 = arith.addf %100, %101 : vector<32x32xf32>
    %cst_59 = arith.constant 0.000000e+00 : f32
    %103 = vector.broadcast %cst_59 : f32 to vector<32x32xf32>
    %104 = arith.cmpf ogt, %102, %103 : vector<32x32xf32>
    %cst_60 = arith.constant 0.00999999977 : f32
    %105 = vector.broadcast %cst_60 : f32 to vector<32x32xf32>
    %106 = arith.mulf %105, %102 : vector<32x32xf32>
    %107 = arith.select %104, %102, %106 : vector<32x32xi1>, vector<32x32xf32>
    %cst_61 = arith.constant dense<0xFF800000> : vector<32xf32>
    %108 = vector.multi_reduction <maximumf>, %107, %cst_61 [1] : vector<32x32xf32> to vector<32xf32>
    %109 = vector.shape_cast %108 : vector<32xf32> to vector<32x1xf32>
    %110 = vector.broadcast %109 : vector<32x1xf32> to vector<32x32xf32>
    %111 = arith.subf %107, %110 : vector<32x32xf32>
    %112 = math.exp %111 : vector<32x32xf32>
    %cst_62 = arith.constant dense<0.000000e+00> : vector<32xf32>
    %113 = vector.multi_reduction <add>, %112, %cst_62 [1] : vector<32x32xf32> to vector<32xf32>
    %114 = vector.shape_cast %113 : vector<32xf32> to vector<32x1xf32>
    %115 = tpu.reciprocal %114 {approx = true} : vector<32x1xf32> -> vector<32x1xf32>
    %116 = vector.broadcast %115 : vector<32x1xf32> to vector<32x32xf32>
    %117 = arith.mulf %112, %116 : vector<32x32xf32>
    %118 = arith.mulf %1, %117 : vector<32x32xf32>
    %cst_63 = arith.constant dense<0.000000e+00> : vector<32x128xf32>
    %119 = tpu.matmul %118, %89, %cst_63 {dimension_numbers = #tpu.dot_dimension_numbers<[1], [0], [0], [1], [0, 0, 1, 1], [], []>} : vector<32x32xf32>, vector<32x128xf32>, vector<32x128xf32> -> vector<32x128xf32>
    %cst_64 = arith.constant 1.000000e+00 : f32
    %120 = arith.addf %cst_64, %90 : f32
    %121 = vector.broadcast %120 : f32 to vector<32x128xf32>
    %122 = arith.mulf %121, %89 : vector<32x128xf32>
    %123 = arith.addf %119, %122 : vector<32x128xf32>
    %c1_65 = arith.constant 1 : index
    %c0_66 = arith.constant 0 : index
    %c0_67 = arith.constant 0 : index
    %124 = vector.load %arg6[%c1_65, %c0_66, %c0_67] : memref<2x128x128xf32, #tpu.memory_space<vmem>>, vector<1x128x128xf32>
    %125 = vector.shape_cast %124 : vector<1x128x128xf32> to vector<128x128xf32>
    %cst_68 = arith.constant dense<0.000000e+00> : vector<32x128xf32>
    %126 = tpu.matmul %123, %125, %cst_68 {dimension_numbers = #tpu.dot_dimension_numbers<[1], [0], [0], [1], [0, 0, 1, 1], [], []>} : vector<32x128xf32>, vector<128x128xf32>, vector<32x128xf32> -> vector<32x128xf32>
    %c1_69 = arith.constant 1 : index
    %c0_70 = arith.constant 0 : index
    %c0_71 = arith.constant 0 : index
    %127 = vector.load %arg7[%c1_69, %c0_70, %c0_71] : memref<2x1x128xf32, #tpu.memory_space<vmem>>, vector<1x1x128xf32>
    %128 = vector.shape_cast %127 : vector<1x1x128xf32> to vector<1x128xf32>
    %129 = vector.broadcast %128 : vector<1x128xf32> to vector<32x128xf32>
    %130 = arith.addf %126, %129 : vector<32x128xf32>
    %cst_72 = arith.constant dense<0.000000e+00> : vector<128xf32>
    %131 = vector.multi_reduction <add>, %130, %cst_72 [0] : vector<32x128xf32> to vector<128xf32>
    %132 = vector.shape_cast %131 : vector<128xf32> to vector<1x128xf32>
    %cst_73 = arith.constant 3.200000e+01 : f32
    %133 = vector.broadcast %cst_73 : f32 to vector<1x128xf32>
    %134 = arith.divf %132, %133 : vector<1x128xf32>
    %135 = vector.broadcast %134 : vector<1x128xf32> to vector<32x128xf32>
    %136 = arith.subf %130, %135 : vector<32x128xf32>
    %137 = arith.mulf %136, %136 : vector<32x128xf32>
    %cst_74 = arith.constant dense<0.000000e+00> : vector<128xf32>
    %138 = vector.multi_reduction <add>, %137, %cst_74 [0] : vector<32x128xf32> to vector<128xf32>
    %139 = vector.shape_cast %138 : vector<128xf32> to vector<1x128xf32>
    %cst_75 = arith.constant 3.200000e+01 : f32
    %140 = vector.broadcast %cst_75 : f32 to vector<1x128xf32>
    %141 = arith.divf %139, %140 : vector<1x128xf32>
    %142 = vector.broadcast %134 : vector<1x128xf32> to vector<32x128xf32>
    %143 = arith.subf %130, %142 : vector<32x128xf32>
    %cst_76 = arith.constant 9.99999974E-6 : f32
    %144 = vector.broadcast %cst_76 : f32 to vector<1x128xf32>
    %145 = arith.addf %141, %144 : vector<1x128xf32>
    %146 = math.rsqrt %145 : vector<1x128xf32>
    %147 = vector.broadcast %146 : vector<1x128xf32> to vector<32x128xf32>
    %148 = arith.mulf %143, %147 : vector<32x128xf32>
    %cst_77 = arith.constant 0.000000e+00 : f32
    %149 = vector.broadcast %cst_77 : f32 to vector<32x128xf32>
    %150 = arith.maximumf %148, %149 : vector<32x128xf32>
    %c1_78 = arith.constant 1 : index
    %c0_79 = arith.constant 0 : index
    %c0_80 = arith.constant 0 : index
    %151 = vector.load %arg8[%c1_78, %c0_79, %c0_80] : memref<2x128x128xf32, #tpu.memory_space<vmem>>, vector<1x128x128xf32>
    %152 = vector.shape_cast %151 : vector<1x128x128xf32> to vector<128x128xf32>
    %cst_81 = arith.constant dense<0.000000e+00> : vector<32x128xf32>
    %153 = tpu.matmul %150, %152, %cst_81 {dimension_numbers = #tpu.dot_dimension_numbers<[1], [0], [0], [1], [0, 0, 1, 1], [], []>} : vector<32x128xf32>, vector<128x128xf32>, vector<32x128xf32> -> vector<32x128xf32>
    %c1_82 = arith.constant 1 : index
    %c0_83 = arith.constant 0 : index
    %c0_84 = arith.constant 0 : index
    %154 = vector.load %arg9[%c1_82, %c0_83, %c0_84] : memref<2x1x128xf32, #tpu.memory_space<vmem>>, vector<1x1x128xf32>
    %155 = vector.shape_cast %154 : vector<1x1x128xf32> to vector<1x128xf32>
    %156 = vector.broadcast %155 : vector<1x128xf32> to vector<32x128xf32>
    %157 = arith.addf %153, %156 : vector<32x128xf32>
    %cst_85 = arith.constant dense<0.000000e+00> : vector<128xf32>
    %158 = vector.multi_reduction <add>, %157, %cst_85 [0] : vector<32x128xf32> to vector<128xf32>
    %159 = vector.shape_cast %158 : vector<128xf32> to vector<1x128xf32>
    %cst_86 = arith.constant 3.200000e+01 : f32
    %160 = vector.broadcast %cst_86 : f32 to vector<1x128xf32>
    %161 = arith.divf %159, %160 : vector<1x128xf32>
    %162 = vector.broadcast %161 : vector<1x128xf32> to vector<32x128xf32>
    %163 = arith.subf %157, %162 : vector<32x128xf32>
    %164 = arith.mulf %163, %163 : vector<32x128xf32>
    %cst_87 = arith.constant dense<0.000000e+00> : vector<128xf32>
    %165 = vector.multi_reduction <add>, %164, %cst_87 [0] : vector<32x128xf32> to vector<128xf32>
    %166 = vector.shape_cast %165 : vector<128xf32> to vector<1x128xf32>
    %cst_88 = arith.constant 3.200000e+01 : f32
    %167 = vector.broadcast %cst_88 : f32 to vector<1x128xf32>
    %168 = arith.divf %166, %167 : vector<1x128xf32>
    %169 = vector.broadcast %161 : vector<1x128xf32> to vector<32x128xf32>
    %170 = arith.subf %157, %169 : vector<32x128xf32>
    %cst_89 = arith.constant 9.99999974E-6 : f32
    %171 = vector.broadcast %cst_89 : f32 to vector<1x128xf32>
    %172 = arith.addf %168, %171 : vector<1x128xf32>
    %173 = math.rsqrt %172 : vector<1x128xf32>
    %174 = vector.broadcast %173 : vector<1x128xf32> to vector<32x128xf32>
    %175 = arith.mulf %170, %174 : vector<32x128xf32>
    %cst_90 = arith.constant 0.000000e+00 : f32
    %176 = vector.broadcast %cst_90 : f32 to vector<32x128xf32>
    %177 = arith.maximumf %175, %176 : vector<32x128xf32>
    %c0_91 = arith.constant 0 : index
    %c0_92 = arith.constant 0 : index
    %178 = vector.load %arg11[%c0_91, %c0_92] : memref<32x128xf32, #tpu.memory_space<vmem>>, vector<32x128xf32>
    tpu.vector_store %arg11[%c0_91, %c0_92], %177 {strides = array<i32>} : memref<32x128xf32, #tpu.memory_space<vmem>>, vector<32x128xf32>,
    %c0_93 = arith.constant 0 : index
    %c0_94 = arith.constant 0 : index
    %179 = vector.load %arg2[%c0_93, %c0_94] : memref<2x32xf32, #tpu.memory_space<vmem>>, vector<2x32xf32>
    %cst_95 = arith.constant dense<0.000000e+00> : vector<2x128xf32>
    %180 = tpu.matmul %179, %177, %cst_95 {dimension_numbers = #tpu.dot_dimension_numbers<[1], [0], [0], [1], [0, 0, 1, 1], [], []>} : vector<2x32xf32>, vector<32x128xf32>, vector<2x128xf32> -> vector<2x128xf32>
    %c0_96 = arith.constant 0 : index
    %c0_97 = arith.constant 0 : index
    %181 = vector.load %arg12[%c0_96, %c0_97] : memref<2x128xf32, #tpu.memory_space<vmem>>, vector<2x128xf32>
    tpu.vector_store %arg12[%c0_96, %c0_97], %180 {strides = array<i32>} : memref<2x128xf32, #tpu.memory_space<vmem>>, vector<2x128xf32>,
    return
  }
}

</mosaic_0001>

<llo_original>
// kernel: graphcnn_forward.1
$region0: #{graphcnn_forward.1}
  #allocation0 [shape = 'u32[]', space=smem, size = 0x4, offset = 0x4, fixed_abs, tag = 'smem constant byte address 0x4 - core index']
  #allocation1 [shape = 'u32[144,128]{1,0:T(1,128)}', space=vmem, size = 0x12000, scoped, tag = 'internal scratch']
  %s0 = inlined_call_operand.vmem [shape: f32[32,128], index: 0, kind: input, shape index: {}]
  %s1 = inlined_call_operand.vmem [shape: f32[32,32], index: 1, kind: input, shape index: {}]
  %s2 = inlined_call_operand.vmem [shape: f32[2,32], index: 2, kind: input, shape index: {}]
  %s3 = inlined_call_operand.vmem [shape: f32[2,128,128], index: 3, kind: input, shape index: {}]
  %s4 = inlined_call_operand.vmem [shape: f32[2,128,1], index: 4, kind: input, shape index: {}]
  %s5 = inlined_call_operand.vmem [shape: f32[2,1,128], index: 5, kind: input, shape index: {}]
  %s6 = inlined_call_operand.hbm [shape: f32[2,128,128], index: 6, kind: input, shape index: {}]
  %s7 = inlined_call_operand.vmem [shape: f32[2,1,128], index: 7, kind: input, shape index: {}]
  %s8 = inlined_call_operand.hbm [shape: f32[2,128,128], index: 8, kind: input, shape index: {}]
  %s9 = inlined_call_operand.vmem [shape: f32[2,1,128], index: 9, kind: input, shape index: {}]
  %s10 = inlined_call_operand.vmem [shape: f32[2], index: 10, kind: input, shape index: {}]
  %s11 = inlined_call_operand.hbm [shape: f32[32,128], index: 11, kind: output, shape index: {0}]
  %s12 = inlined_call_operand.hbm [shape: f32[2,128], index: 12, kind: output, shape index: {1}]
  %13 = xla_tuple %s11, %s12
  %s14 = sld [smem:[#allocation0]]
  $region74: #{graphcnn_forward.1} parent=0
    _
  %s16 = ssub.s32 1, %s14
  %s17 = scalar_select 0, %s16, %s14
  $region1: #{graphcnn_forward.1} parent=0
    #allocation2 [shape = 'u8[131072]{0}', space=vmem, size = 0x20000, scoped, tag = 'input window, operand 6, single buffered']
    #allocation3 [shape = 's32[1]{0}', space=sflag, size = 0x4, scoped, tag = 'scoped memory for graphcnn_forward.1']
    #allocation4 [shape = 's32[1]{0}', space=sflag, size = 0x4, scoped, tag = 'scoped memory for graphcnn_forward.1']
    #allocation5 [shape = 's32[1]{0}', space=sflag, size = 0x4, scoped, tag = 'scoped memory for graphcnn_forward.1']
    #allocation6 [shape = 'u8[131072]{0}', space=vmem, size = 0x20000, scoped, tag = 'input window, operand 8, single buffered']
    #allocation7 [shape = 's32[1]{0}', space=sflag, size = 0x4, scoped, tag = 'scoped memory for graphcnn_forward.1']
    #allocation8 [shape = 'u8[512]{0}', space=smem, size = 0x200, scoped, tag = 'input window, operand 10, single buffered']
    #allocation9 [shape = 'u8[16384]{0}', space=vmem, size = 0x4000, scoped, tag = 'output window, operand 0, single buffered']
    #allocation10 [shape = 'u8[1024]{0}', space=vmem, size = 0x400, scoped, tag = 'output window, operand 1, single buffered']
    #allocation11 [shape = 's32[1]{0}', space=sflag, size = 0x4, scoped, tag = 'scoped memory for graphcnn_forward.1']
    %18 = vsyncpa [#allocation3], 0
    %19 = vsyncpa [#allocation7], 0
    %20 = vsyncpa [#allocation5], 0
    %21 = vsyncpa [#allocation4], 0
    %22 = vsyncpa [#allocation11], 0
    // Predicated region
    $region2: #{graphcnn_forward.1} parent=1 // pred_check
      _
    $region3: #{graphcnn_forward.1} parent=1 // pred_check_branch
      %24 = sbr.rel (0) target = $region5
    $region4: #{graphcnn_forward.1} parent=1 // pred_region
      _
    $region5: #{graphcnn_forward.1} parent=1 // pred_fallthru
      _
    // Predicated region
    $region6: #{graphcnn_forward.1} parent=1 // pred_check
      _
    $region7: #{graphcnn_forward.1} parent=1 // pred_check_branch
      %26 = sbr.rel (0) target = $region9
    $region8: #{graphcnn_forward.1} parent=1 // pred_region
      _
    $region9: #{graphcnn_forward.1} parent=1 // pred_fallthru
      _
    // Predicated region
    $region10: #{graphcnn_forward.1} parent=1 // pred_check
      _
    $region11: #{graphcnn_forward.1} parent=1 // pred_check_branch
      %28 = sbr.rel (0) target = $region13
    $region12: #{graphcnn_forward.1} parent=1 // pred_region
      _
    $region13: #{graphcnn_forward.1} parent=1 // pred_fallthru
      _
    // Predicated region
    $region14: #{graphcnn_forward.1} parent=1 // pred_check
      _
    $region15: #{graphcnn_forward.1} parent=1 // pred_check_branch
      %30 = sbr.rel (0) target = $region17
    $region16: #{graphcnn_forward.1} parent=1 // pred_region
      _
    $region17: #{graphcnn_forward.1} parent=1 // pred_fallthru
      _
    // Predicated region
    $region18: #{graphcnn_forward.1} parent=1 // pred_check
      _
    $region19: #{graphcnn_forward.1} parent=1 // pred_check_branch
      %32 = sbr.rel (0) target = $region21
    $region20: #{graphcnn_forward.1} parent=1 // pred_region
      _
    $region21: #{graphcnn_forward.1} parent=1 // pred_fallthru
      _
    // Predicated region
    $region22: #{graphcnn_forward.1} parent=1 // pred_check
      _
    $region23: #{graphcnn_forward.1} parent=1 // pred_check_branch
      %34 = sbr.rel (0) target = $region25
    $region24: #{graphcnn_forward.1} parent=1 // pred_region
      _
    $region25: #{graphcnn_forward.1} parent=1 // pred_fallthru
      _
    // Predicated region
    $region26: #{graphcnn_forward.1} parent=1 // pred_check
      _
    $region27: #{graphcnn_forward.1} parent=1 // pred_check_branch
      %36 = sbr.rel (0) target = $region29
    $region28: #{graphcnn_forward.1} parent=1 // pred_region
      %s38 = ssub.s32 4096, 4096
      %39 = vsyncadd [#allocation3], %s38
      %s40 = sshll.u32 [#allocation2], 4
      %s41 = int_to_ptr.vmem [resolvable:$true] %s40
      %46 = dma.hbm_to_vmem [thread:$0]  %s6, 4096, %s41, [#allocation3], 128, 128, 8
    $region29: #{graphcnn_forward.1} parent=1 // pred_fallthru
      _
    // Predicated region
    $region30: #{graphcnn_forward.1} parent=1 // pred_check
      _
    $region31: #{graphcnn_forward.1} parent=1 // pred_check_branch
      %48 = sbr.rel (0) target = $region33
    $region32: #{graphcnn_forward.1} parent=1 // pred_region
      _
    $region33: #{graphcnn_forward.1} parent=1 // pred_fallthru
      _
    // Predicated region
    $region34: #{graphcnn_forward.1} parent=1 // pred_check
      _
    $region35: #{graphcnn_forward.1} parent=1 // pred_check_branch
      %50 = sbr.rel (0) target = $region37
    $region36: #{graphcnn_forward.1} parent=1 // pred_region
      %s52 = ssub.s32 4096, 4096
      %53 = vsyncadd [#allocation7], %s52
      %s54 = sshll.u32 [#allocation6], 4
      %s55 = int_to_ptr.vmem [resolvable:$true] %s54
      %60 = dma.hbm_to_vmem [thread:$0]  %s8, 4096, %s55, [#allocation7], 128, 128, 8
    $region37: #{graphcnn_forward.1} parent=1 // pred_fallthru
      _
    // Predicated region
    $region38: #{graphcnn_forward.1} parent=1 // pred_check
      _
    $region39: #{graphcnn_forward.1} parent=1 // pred_check_branch
      %62 = sbr.rel (0) target = $region41
    $region40: #{graphcnn_forward.1} parent=1 // pred_region
      _
    $region41: #{graphcnn_forward.1} parent=1 // pred_fallthru
      _
    // Predicated region
    $region42: #{graphcnn_forward.1} parent=1 // pred_check
      _
    $region43: #{graphcnn_forward.1} parent=1 // pred_check_branch
      %64 = sbr.rel (0) target = $region45
    $region44: #{graphcnn_forward.1} parent=1 // pred_region
      %s66 = ssub.s32 16, 16
      %67 = vsyncadd [#allocation5], %s66
      %s69 = sshll.u32 %s10, 4
      %s70 = int_to_ptr.vmem [resolvable:$true] %s69
      %72 = dma.vmem_to_smem %s70, 16, [#allocation8], [#allocation5]
    $region45: #{graphcnn_forward.1} parent=1 // pred_fallthru
      _
    // Predicated region
    $region46: #{graphcnn_forward.1} parent=1 // pred_check
      _
    $region47: #{graphcnn_forward.1} parent=1 // pred_check_branch
      %74 = sbr.rel (0) target = $region49
    $region48: #{graphcnn_forward.1} parent=1 // pred_region
      %75 = dma.done [#allocation3], 4096
    $region49: #{graphcnn_forward.1} parent=1 // pred_fallthru
      _
    // Predicated region
    $region50: #{graphcnn_forward.1} parent=1 // pred_check
      _
    $region51: #{graphcnn_forward.1} parent=1 // pred_check_branch
      %77 = sbr.rel (0) target = $region53
    $region52: #{graphcnn_forward.1} parent=1 // pred_region
      %78 = dma.done [#allocation7], 4096
    $region53: #{graphcnn_forward.1} parent=1 // pred_fallthru
      _
    // Predicated region
    $region54: #{graphcnn_forward.1} parent=1 // pred_check
      _
    $region55: #{graphcnn_forward.1} parent=1 // pred_check_branch
      %80 = sbr.rel (0) target = $region57
    $region56: #{graphcnn_forward.1} parent=1 // pred_region
      %81 = dma.done [#allocation5], 16
    $region57: #{graphcnn_forward.1} parent=1 // pred_fallthru
      _
    %82 = sfence
    %v83 = vld [vmem:[%s0] sm:$0xff]
    %v84 = vld [vmem:[%s0 + $0x8] sm:$0xff]
    %v85 = vld [vmem:[%s0 + $0x10] sm:$0xff]
    %v86 = vld [vmem:[%s0 + $0x18] sm:$0xff]
    %v87 = vld [vmem:[%s1] sm:$0xff]
    %v88 = vld [vmem:[%s1 + $0x8] sm:$0xff]
    %v89 = vld [vmem:[%s1 + $0x10] sm:$0xff]
    %v90 = vld [vmem:[%s1 + $0x18] sm:$0xff]
    %s91 = sld [smem:[#allocation8]]
    %v92 = vld [vmem:[%s3] sm:$0xff]
    %v93 = vld [vmem:[%s3 + $0x8] sm:$0xff]
    %v94 = vld [vmem:[%s3 + $0x10] sm:$0xff]
    %v95 = vld [vmem:[%s3 + $0x18] sm:$0xff]
    %v96 = vld [vmem:[%s3 + $0x20] sm:$0xff]
    %v97 = vld [vmem:[%s3 + $0x28] sm:$0xff]
    %v98 = vld [vmem:[%s3 + $0x30] sm:$0xff]
    %v99 = vld [vmem:[%s3 + $0x38] sm:$0xff]
    %v100 = vld [vmem:[%s3 + $0x40] sm:$0xff]
    %v101 = vld [vmem:[%s3 + $0x48] sm:$0xff]
    %v102 = vld [vmem:[%s3 + $0x50] sm:$0xff]
    %v103 = vld [vmem:[%s3 + $0x58] sm:$0xff]
    %v104 = vld [vmem:[%s3 + $0x60] sm:$0xff]
    %v105 = vld [vmem:[%s3 + $0x68] sm:$0xff]
    %v106 = vld [vmem:[%s3 + $0x70] sm:$0xff]
    %v107 = vld [vmem:[%s3 + $0x78] sm:$0xff]
    %108 = vmatprep.subr.mxu0 0.0
    %109 = vmatpush1.msra.mxu0 %v107
    %110 = vmatprep.subr.mxu0 0.0
    %111 = vmatpush1.msra.mxu0 %v106
    %112 = vmatprep.subr.mxu0 0.0
    %113 = vmatpush1.msra.mxu0 %v105
    %114 = vmatprep.subr.mxu0 0.0
    %115 = vmatpush1.msra.mxu0 %v104
    %116 = vmatprep.subr.mxu0 0.0
    %117 = vmatpush1.msra.mxu0 %v103
    %118 = vmatprep.subr.mxu0 0.0
    %119 = vmatpush1.msra.mxu0 %v102
    %120 = vmatprep.subr.mxu0 0.0
    %121 = vmatpush1.msra.mxu0 %v101
    %122 = vmatprep.subr.mxu0 0.0
    %123 = vmatpush1.msra.mxu0 %v100
    %124 = vmatprep.subr.mxu0 0.0
    %125 = vmatpush1.msra.mxu0 %v99
    %126 = vmatprep.subr.mxu0 0.0
    %127 = vmatpush1.msra.mxu0 %v98
    %128 = vmatprep.subr.mxu0 0.0
    %129 = vmatpush1.msra.mxu0 %v97
    %130 = vmatprep.subr.mxu0 0.0
    %131 = vmatpush1.msra.mxu0 %v96
    %132 = vmatprep.subr.mxu0 0.0
    %133 = vmatpush1.msra.mxu0 %v95
    %134 = vmatprep.subr.mxu0 0.0
    %135 = vmatpush1.msra.mxu0 %v94
    %136 = vmatprep.subr.mxu0 0.0
    %137 = vmatpush1.msra.mxu0 %v93
    %138 = vmatprep.subr.mxu0 0.0
    %139 = vmatpush1.msra.mxu0 %v92
    %140 = vmatprep.subr.mxu0 0.0
    %141 = vmatpush2.msra.mxu0 0.0
    %142 = vmatprep.subr.mxu0 0.0
    %143 = vmatpush2.msra.mxu0 0.0
    %144 = vmatprep.subr.mxu0 0.0
    %145 = vmatpush2.msra.mxu0 0.0
    %146 = vmatprep.subr.mxu0 0.0
    %147 = vmatpush2.msra.mxu0 0.0
    %148 = vmatprep.subr.mxu0 0.0
    %149 = vmatpush2.msra.mxu0 0.0
    %150 = vmatprep.subr.mxu0 0.0
    %151 = vmatpush2.msra.mxu0 0.0
    %152 = vmatprep.subr.mxu0 0.0
    %153 = vmatpush2.msra.mxu0 0.0
    %154 = vmatprep.subr.mxu0 0.0
    %155 = vmatpush2.msra.mxu0 0.0
    %156 = vmatprep.subr.mxu0 0.0
    %157 = vmatpush2.msra.mxu0 0.0
    %158 = vmatprep.subr.mxu0 0.0
    %159 = vmatpush2.msra.mxu0 0.0
    %160 = vmatprep.subr.mxu0 0.0
    %161 = vmatpush2.msra.mxu0 0.0
    %162 = vmatprep.subr.mxu0 0.0
    %163 = vmatpush2.msra.mxu0 0.0
    %164 = vmatprep.subr.mxu0 0.0
    %165 = vmatpush2.msra.mxu0 0.0
    %166 = vmatprep.subr.mxu0 0.0
    %167 = vmatpush2.msra.mxu0 0.0
    %168 = vmatprep.subr.mxu0 0.0
    %169 = vmatpush2.msra.mxu0 0.0
    %170 = vmatprep.subr.mxu0 0.0
    %171 = vmatpush2.msra.mxu0 0.0
    %172 = vmatprep.mubr.f32.mxu0 0.0
    %173 = vmatmul.mubr.f32.gmra.mxu0 %v83
    %v174 = vpop.f32.mrf.mxu0
    %v175 = vadd.f32 0.0, %v174
    %v176 = vpop.f32.mrf.mxu0
    %177 = vmatprep.mubr.f32.mxu0 0.0
    %178 = vmatmul.mubr.f32.gmra.mxu0 %v84
    %v179 = vpop.f32.mrf.mxu0
    %v180 = vadd.f32 0.0, %v179
    %v181 = vpop.f32.mrf.mxu0
    %182 = vmatprep.mubr.f32.mxu0 0.0
    %183 = vmatmul.mubr.f32.gmra.mxu0 %v85
    %v184 = vpop.f32.mrf.mxu0
    %v185 = vadd.f32 0.0, %v184
    %v186 = vpop.f32.mrf.mxu0
    %187 = vmatprep.mubr.f32.mxu0 0.0
    %188 = vmatmul.mubr.f32.gmra.mxu0 %v86
    %v189 = vpop.f32.mrf.mxu0
    %v190 = vadd.f32 0.0, %v189
    %v191 = vpop.f32.mrf.mxu0
    %192 = vdwg.mxu0
    %v193 = vld [vmem:[%s4] sm:$0xff]
    %v194 = vld [vmem:[%s4 + $0x8] sm:$0xff]
    %v195 = vld [vmem:[%s4 + $0x10] sm:$0xff]
    %v196 = vld [vmem:[%s4 + $0x18] sm:$0xff]
    %v197 = vld [vmem:[%s4 + $0x20] sm:$0xff]
    %v198 = vld [vmem:[%s4 + $0x28] sm:$0xff]
    %v199 = vld [vmem:[%s4 + $0x30] sm:$0xff]
    %v200 = vld [vmem:[%s4 + $0x38] sm:$0xff]
    %v201 = vld [vmem:[%s4 + $0x40] sm:$0xff]
    %v202 = vld [vmem:[%s4 + $0x48] sm:$0xff]
    %v203 = vld [vmem:[%s4 + $0x50] sm:$0xff]
    %v204 = vld [vmem:[%s4 + $0x58] sm:$0xff]
    %v205 = vld [vmem:[%s4 + $0x60] sm:$0xff]
    %v206 = vld [vmem:[%s4 + $0x68] sm:$0xff]
    %v207 = vld [vmem:[%s4 + $0x70] sm:$0xff]
    %v208 = vld [vmem:[%s4 + $0x78] sm:$0xff]
    %209 = vmatprep.subr.mxu0 0.0
    %210 = vmatpush1.msra.mxu0 %v208
    %211 = vmatprep.subr.mxu0 0.0
    %212 = vmatpush1.msra.mxu0 %v207
    %213 = vmatprep.subr.mxu0 0.0
    %214 = vmatpush1.msra.mxu0 %v206
    %215 = vmatprep.subr.mxu0 0.0
    %216 = vmatpush1.msra.mxu0 %v205
    %217 = vmatprep.subr.mxu0 0.0
    %218 = vmatpush1.msra.mxu0 %v204
    %219 = vmatprep.subr.mxu0 0.0
    %220 = vmatpush1.msra.mxu0 %v203
    %221 = vmatprep.subr.mxu0 0.0
    %222 = vmatpush1.msra.mxu0 %v202
    %223 = vmatprep.subr.mxu0 0.0
    %224 = vmatpush1.msra.mxu0 %v201
    %225 = vmatprep.subr.mxu0 0.0
    %226 = vmatpush1.msra.mxu0 %v200
    %227 = vmatprep.subr.mxu0 0.0
    %228 = vmatpush1.msra.mxu0 %v199
    %229 = vmatprep.subr.mxu0 0.0
    %230 = vmatpush1.msra.mxu0 %v198
    %231 = vmatprep.subr.mxu0 0.0
    %232 = vmatpush1.msra.mxu0 %v197
    %233 = vmatprep.subr.mxu0 0.0
    %234 = vmatpush1.msra.mxu0 %v196
    %235 = vmatprep.subr.mxu0 0.0
    %236 = vmatpush1.msra.mxu0 %v195
    %237 = vmatprep.subr.mxu0 0.0
    %238 = vmatpush1.msra.mxu0 %v194
    %239 = vmatprep.subr.mxu0 0.0
    %240 = vmatpush1.msra.mxu0 %v193
    %241 = vmatprep.subr.mxu0 0.0
    %242 = vmatpush2.msra.mxu0 0.0
    %243 = vmatprep.subr.mxu0 0.0
    %244 = vmatpush2.msra.mxu0 0.0
    %245 = vmatprep.subr.mxu0 0.0
    %246 = vmatpush2.msra.mxu0 0.0
    %247 = vmatprep.subr.mxu0 0.0
    %248 = vmatpush2.msra.mxu0 0.0
    %249 = vmatprep.subr.mxu0 0.0
    %250 = vmatpush2.msra.mxu0 0.0
    %251 = vmatprep.subr.mxu0 0.0
    %252 = vmatpush2.msra.mxu0 0.0
    %253 = vmatprep.subr.mxu0 0.0
    %254 = vmatpush2.msra.mxu0 0.0
    %255 = vmatprep.subr.mxu0 0.0
    %256 = vmatpush2.msra.mxu0 0.0
    %257 = vmatprep.subr.mxu0 0.0
    %258 = vmatpush2.msra.mxu0 0.0
    %259 = vmatprep.subr.mxu0 0.0
    %260 = vmatpush2.msra.mxu0 0.0
    %261 = vmatprep.subr.mxu0 0.0
    %262 = vmatpush2.msra.mxu0 0.0
    %263 = vmatprep.subr.mxu0 0.0
    %264 = vmatpush2.msra.mxu0 0.0
    %265 = vmatprep.subr.mxu0 0.0
    %266 = vmatpush2.msra.mxu0 0.0
    %267 = vmatprep.subr.mxu0 0.0
    %268 = vmatpush2.msra.mxu0 0.0
    %269 = vmatprep.subr.mxu0 0.0
    %270 = vmatpush2.msra.mxu0 0.0
    %271 = vmatprep.subr.mxu0 0.0
    %272 = vmatpush2.msra.mxu0 0.0
    %273 = vmatprep.mubr.f32.mxu0 0.0
    %274 = vmatmul.mubr.f32.gmra.mxu0 %v175
    %v275 = vpop.f32.mrf.mxu0
    %v276 = vadd.f32 0.0, %v275
    %v277 = vpop.f32.mrf.mxu0
    %278 = vmatprep.mubr.f32.mxu0 0.0
    %279 = vmatmul.mubr.f32.gmra.mxu0 %v180
    %v280 = vpop.f32.mrf.mxu0
    %v281 = vadd.f32 0.0, %v280
    %v282 = vpop.f32.mrf.mxu0
    %283 = vmatprep.mubr.f32.mxu0 0.0
    %284 = vmatmul.mubr.f32.gmra.mxu0 %v185
    %v285 = vpop.f32.mrf.mxu0
    %v286 = vadd.f32 0.0, %v285
    %v287 = vpop.f32.mrf.mxu0
    %288 = vmatprep.mubr.f32.mxu0 0.0
    %289 = vmatmul.mubr.f32.gmra.mxu0 %v190
    %v290 = vpop.f32.mrf.mxu0
    %v291 = vadd.f32 0.0, %v290
    %v292 = vpop.f32.mrf.mxu0
    %293 = vdwg.mxu0
    %v294 = vld [vmem:[%s5] sm:$0x1]
    %295 = vmatprep.subr.mxu0 0.0
    %296 = vmatpush1.xpose.msra.mxu0 0.0
    %297 = vmatprep.subr.mxu0 0.0
    %298 = vmatpush1.xpose.msra.mxu0 0.0
    %299 = vmatprep.subr.mxu0 0.0
    %300 = vmatpush1.xpose.msra.mxu0 0.0
    %301 = vmatprep.subr.mxu0 0.0
    %302 = vmatpush1.xpose.msra.mxu0 0.0
    %303 = vmatprep.subr.mxu0 0.0
    %304 = vmatpush1.xpose.msra.mxu0 0.0
    %305 = vmatprep.subr.mxu0 0.0
    %306 = vmatpush1.xpose.msra.mxu0 0.0
    %307 = vmatprep.subr.mxu0 0.0
    %308 = vmatpush1.xpose.msra.mxu0 0.0
    %309 = vmatprep.subr.mxu0 0.0
    %310 = vmatpush1.xpose.msra.mxu0 0.0
    %311 = vmatprep.subr.mxu0 0.0
    %312 = vmatpush1.xpose.msra.mxu0 0.0
    %313 = vmatprep.subr.mxu0 0.0
    %314 = vmatpush1.xpose.msra.mxu0 0.0
    %315 = vmatprep.subr.mxu0 0.0
    %316 = vmatpush1.xpose.msra.mxu0 0.0
    %317 = vmatprep.subr.mxu0 0.0
    %318 = vmatpush1.xpose.msra.mxu0 0.0
    %319 = vmatprep.subr.mxu0 0.0
    %320 = vmatpush1.xpose.msra.mxu0 %v190
    %321 = vmatprep.subr.mxu0 0.0
    %322 = vmatpush1.xpose.msra.mxu0 %v185
    %323 = vmatprep.subr.mxu0 0.0
    %324 = vmatpush1.xpose.msra.mxu0 %v180
    %325 = vmatprep.subr.mxu0 0.0
    %326 = vmatpush1.xpose.msra.mxu0 %v175
    %327 = vmatprep.subr.mxu0 0.0
    %328 = vmatpush2.xpose.msra.mxu0 0.0
    %329 = vmatprep.subr.mxu0 0.0
    %330 = vmatpush2.xpose.msra.mxu0 0.0
    %331 = vmatprep.subr.mxu0 0.0
    %332 = vmatpush2.xpose.msra.mxu0 0.0
    %333 = vmatprep.subr.mxu0 0.0
    %334 = vmatpush2.xpose.msra.mxu0 0.0
    %335 = vmatprep.subr.mxu0 0.0
    %336 = vmatpush2.xpose.msra.mxu0 0.0
    %337 = vmatprep.subr.mxu0 0.0
    %338 = vmatpush2.xpose.msra.mxu0 0.0
    %339 = vmatprep.subr.mxu0 0.0
    %340 = vmatpush2.xpose.msra.mxu0 0.0
    %341 = vmatprep.subr.mxu0 0.0
    %342 = vmatpush2.xpose.msra.mxu0 0.0
    %343 = vmatprep.subr.mxu0 0.0
    %344 = vmatpush2.xpose.msra.mxu0 0.0
    %345 = vmatprep.subr.mxu0 0.0
    %346 = vmatpush2.xpose.msra.mxu0 0.0
    %347 = vmatprep.subr.mxu0 0.0
    %348 = vmatpush2.xpose.msra.mxu0 0.0
    %349 = vmatprep.subr.mxu0 0.0
    %350 = vmatpush2.xpose.msra.mxu0 0.0
    %351 = vmatprep.subr.mxu0 0.0
    %352 = vmatpush2.xpose.msra.mxu0 0.0
    %353 = vmatprep.subr.mxu0 0.0
    %354 = vmatpush2.xpose.msra.mxu0 0.0
    %355 = vmatprep.subr.mxu0 0.0
    %356 = vmatpush2.xpose.msra.mxu0 0.0
    %357 = vmatprep.subr.mxu0 0.0
    %358 = vmatpush2.xpose.msra.mxu0 0.0
    %359 = vmatprep.mubr.f32.mxu0 0.0
    %360 = vmatmul.mubr.f32.gmra.mxu0 %v294
    %v361 = vpop.f32.mrf.mxu0
    %v362 = vadd.f32 0.0, %v361
    %v363 = vpop.f32.mrf.mxu0
    %364 = vdwg.mxu0
    %366 = vset.pattern.permute.xlu0 0
    %367 = vperm.xlu0 %366, %v276
    %v368 = vpop.permute.xlu0 %367
    %371 = vset.pattern.permute.xlu0 0
    %372 = vperm.xlu0 %371, %v281
    %v373 = vpop.permute.xlu0 %372
    %376 = vset.pattern.permute.xlu0 0
    %377 = vperm.xlu0 %376, %v286
    %v378 = vpop.permute.xlu0 %377
    %381 = vset.pattern.permute.xlu0 0
    %382 = vperm.xlu0 %381, %v291
    %v383 = vpop.permute.xlu0 %382
    %v385 = vlaneseq
    %v386 = vshrl.u32 %v385, 7
    %v387 = vsub.s32 0, %v386
    %v388 = vrot.slane %v362, %v387
    %v389 = vadd.f32 %v368, %v388
    %v390 = vadd.f32 %v373, %v388
    %v391 = vadd.f32 %v378, %v388
    %v392 = vadd.f32 %v383, %v388
    %vm393 = vcmp.gt.f32.partialorder %v389, 0.0
    %vm394 = vcmp.gt.f32.partialorder %v390, 0.0
    %vm395 = vcmp.gt.f32.partialorder %v391, 0.0
    %vm396 = vcmp.gt.f32.partialorder %v392, 0.0
    %v397 = vmul.f32 %v389, 0.01
    %v398 = vmul.f32 %v390, 0.01
    %v399 = vmul.f32 %v391, 0.01
    %v400 = vmul.f32 %v392, 0.01
    %v401 = vsel %vm393, %v389, %v397
    %v402 = vsel %vm394, %v390, %v398
    %v403 = vsel %vm395, %v391, %v399
    %v404 = vsel %vm396, %v392, %v400
    %vm405 = vcmask 261120
    %v406 = vsel %vm405, %v401, -inf
    %407 = vmax.xlane.f32.xlu0 %v406
    %v408 = vpop.xlane.xlu0 %407
    %v409 = vsel %vm405, %v402, -inf
    %410 = vmax.xlane.f32.xlu0 %v409
    %v411 = vpop.xlane.xlu0 %410
    %v412 = vsel %vm405, %v403, -inf
    %413 = vmax.xlane.f32.xlu0 %v412
    %v414 = vpop.xlane.xlu0 %413
    %v415 = vsel %vm405, %v404, -inf
    %416 = vmax.xlane.f32.xlu0 %v415
    %v417 = vpop.xlane.xlu0 %416
    %v418 = vsub.f32 %v401, %v408
    %v419 = vsub.f32 %v402, %v411
    %v420 = vsub.f32 %v403, %v414
    %v421 = vsub.f32 %v404, %v417
    %v422 = vmul.f32 %v418, 1.442695
    %v423 = vpow.pop %v422
    %v424 = vmul.f32 %v419, 1.442695
    %v425 = vpow.pop %v424
    %v426 = vmul.f32 %v420, 1.442695
    %v427 = vpow.pop %v426
    %v428 = vmul.f32 %v421, 1.442695
    %v429 = vpow.pop %v428
    %v430 = vsel %vm405, %v423, 0.0
    %431 = vadd.xlane.f32.xlu0 %v430
    %v432 = vpop.xlane.xlu0 %431
    %v433 = vsel %vm405, %v425, 0.0
    %434 = vadd.xlane.f32.xlu0 %v433
    %v435 = vpop.xlane.xlu0 %434
    %v436 = vsel %vm405, %v427, 0.0
    %437 = vadd.xlane.f32.xlu0 %v436
    %v438 = vpop.xlane.xlu0 %437
    %v439 = vsel %vm405, %v429, 0.0
    %440 = vadd.xlane.f32.xlu0 %v439
    %v441 = vpop.xlane.xlu0 %440
    %v442 = vrcp.pop %v432
    %v443 = vrcp.pop %v435
    %v444 = vrcp.pop %v438
    %v445 = vrcp.pop %v441
    %v446 = vmul.f32 %v423, %v442
    %v447 = vmul.f32 %v425, %v443
    %v448 = vmul.f32 %v427, %v444
    %v449 = vmul.f32 %v429, %v445
    %v450 = vmul.f32 %v87, %v446
    %v451 = vmul.f32 %v88, %v447
    %v452 = vmul.f32 %v89, %v448
    %v453 = vmul.f32 %v90, %v449
    %s454 = sadd.f32 %s91, 1.0
    %v455 = vstv %s454
    %v456 = vmul.f32 %v455, %v83
    %v457 = vmul.f32 %v455, %v84
    %v458 = vmul.f32 %v455, %v85
    %v459 = vmul.f32 %v455, %v86
    %v461 = vsel %vm405, %v450, 0
    %v464 = vsel %vm405, %v451, 0
    %v467 = vsel %vm405, %v452, 0
    %v470 = vsel %vm405, %v453, 0
    %472 = vmatprep.subr.mxu0 0.0
    %473 = vmatpush1.msra.mxu0 0.0
    %474 = vmatprep.subr.mxu0 0.0
    %475 = vmatpush1.msra.mxu0 0.0
    %476 = vmatprep.subr.mxu0 0.0
    %477 = vmatpush1.msra.mxu0 0.0
    %478 = vmatprep.subr.mxu0 0.0
    %479 = vmatpush1.msra.mxu0 0.0
    %480 = vmatprep.subr.mxu0 0.0
    %481 = vmatpush1.msra.mxu0 0.0
    %482 = vmatprep.subr.mxu0 0.0
    %483 = vmatpush1.msra.mxu0 0.0
    %484 = vmatprep.subr.mxu0 0.0
    %485 = vmatpush1.msra.mxu0 0.0
    %486 = vmatprep.subr.mxu0 0.0
    %487 = vmatpush1.msra.mxu0 0.0
    %488 = vmatprep.subr.mxu0 0.0
    %489 = vmatpush1.msra.mxu0 0.0
    %490 = vmatprep.subr.mxu0 0.0
    %491 = vmatpush1.msra.mxu0 0.0
    %492 = vmatprep.subr.mxu0 0.0
    %493 = vmatpush1.msra.mxu0 0.0
    %494 = vmatprep.subr.mxu0 0.0
    %495 = vmatpush1.msra.mxu0 0.0
    %496 = vmatprep.subr.mxu0 0.0
    %497 = vmatpush1.msra.mxu0 %v86
    %498 = vmatprep.subr.mxu0 0.0
    %499 = vmatpush1.msra.mxu0 %v85
    %500 = vmatprep.subr.mxu0 0.0
    %501 = vmatpush1.msra.mxu0 %v84
    %502 = vmatprep.subr.mxu0 0.0
    %503 = vmatpush1.msra.mxu0 %v83
    %504 = vmatprep.subr.mxu0 0.0
    %505 = vmatpush2.msra.mxu0 0.0
    %506 = vmatprep.subr.mxu0 0.0
    %507 = vmatpush2.msra.mxu0 0.0
    %508 = vmatprep.subr.mxu0 0.0
    %509 = vmatpush2.msra.mxu0 0.0
    %510 = vmatprep.subr.mxu0 0.0
    %511 = vmatpush2.msra.mxu0 0.0
    %512 = vmatprep.subr.mxu0 0.0
    %513 = vmatpush2.msra.mxu0 0.0
    %514 = vmatprep.subr.mxu0 0.0
    %515 = vmatpush2.msra.mxu0 0.0
    %516 = vmatprep.subr.mxu0 0.0
    %517 = vmatpush2.msra.mxu0 0.0
    %518 = vmatprep.subr.mxu0 0.0
    %519 = vmatpush2.msra.mxu0 0.0
    %520 = vmatprep.subr.mxu0 0.0
    %521 = vmatpush2.msra.mxu0 0.0
    %522 = vmatprep.subr.mxu0 0.0
    %523 = vmatpush2.msra.mxu0 0.0
    %524 = vmatprep.subr.mxu0 0.0
    %525 = vmatpush2.msra.mxu0 0.0
    %526 = vmatprep.subr.mxu0 0.0
    %527 = vmatpush2.msra.mxu0 0.0
    %528 = vmatprep.subr.mxu0 0.0
    %529 = vmatpush2.msra.mxu0 0.0
    %530 = vmatprep.subr.mxu0 0.0
    %531 = vmatpush2.msra.mxu0 0.0
    %532 = vmatprep.subr.mxu0 0.0
    %533 = vmatpush2.msra.mxu0 0.0
    %534 = vmatprep.subr.mxu0 0.0
    %535 = vmatpush2.msra.mxu0 0.0
    %536 = vmatprep.mubr.f32.mxu0 0.0
    %537 = vmatmul.mubr.f32.gmra.mxu0 %v461
    %v538 = vpop.f32.mrf.mxu0
    %v539 = vadd.f32 %v456, %v538
    %v540 = vpop.f32.mrf.mxu0
    %541 = vmatprep.mubr.f32.mxu0 0.0
    %542 = vmatmul.mubr.f32.gmra.mxu0 %v464
    %v543 = vpop.f32.mrf.mxu0
    %v544 = vadd.f32 %v457, %v543
    %v545 = vpop.f32.mrf.mxu0
    %546 = vmatprep.mubr.f32.mxu0 0.0
    %547 = vmatmul.mubr.f32.gmra.mxu0 %v467
    %v548 = vpop.f32.mrf.mxu0
    %v549 = vadd.f32 %v458, %v548
    %v550 = vpop.f32.mrf.mxu0
    %551 = vmatprep.mubr.f32.mxu0 0.0
    %552 = vmatmul.mubr.f32.gmra.mxu0 %v470
    %v553 = vpop.f32.mrf.mxu0
    %v554 = vadd.f32 %v459, %v553
    %v555 = vpop.f32.mrf.mxu0
    %556 = vdwg.mxu0
    %v557 = vld [vmem:[#allocation2] sm:$0xff]
    %v558 = vld [vmem:[#allocation2 + $0x8] sm:$0xff]
    %v559 = vld [vmem:[#allocation2 + $0x10] sm:$0xff]
    %v560 = vld [vmem:[#allocation2 + $0x18] sm:$0xff]
    %v561 = vld [vmem:[#allocation2 + $0x20] sm:$0xff]
    %v562 = vld [vmem:[#allocation2 + $0x28] sm:$0xff]
    %v563 = vld [vmem:[#allocation2 + $0x30] sm:$0xff]
    %v564 = vld [vmem:[#allocation2 + $0x38] sm:$0xff]
    %v565 = vld [vmem:[#allocation2 + $0x40] sm:$0xff]
    %v566 = vld [vmem:[#allocation2 + $0x48] sm:$0xff]
    %v567 = vld [vmem:[#allocation2 + $0x50] sm:$0xff]
    %v568 = vld [vmem:[#allocation2 + $0x58] sm:$0xff]
    %v569 = vld [vmem:[#allocation2 + $0x60] sm:$0xff]
    %v570 = vld [vmem:[#allocation2 + $0x68] sm:$0xff]
    %v571 = vld [vmem:[#allocation2 + $0x70] sm:$0xff]
    %v572 = vld [vmem:[#allocation2 + $0x78] sm:$0xff]
    %v573 = vld [vmem:[%s7] sm:$0x1]
    %v575 = vlaneseq
    %v576 = vshrl.u32 %v575, 7
    %v577 = vsub.s32 0, %v576
    %v578 = vrot.slane %v573, %v577
    %580 = vmatprep.subr.mxu0 0.0
    %581 = vmatpush1.msra.mxu0 %v572
    %582 = vmatprep.subr.mxu0 0.0
    %583 = vmatpush1.msra.mxu0 %v571
    %584 = vmatprep.subr.mxu0 0.0
    %585 = vmatpush1.msra.mxu0 %v570
    %586 = vmatprep.subr.mxu0 0.0
    %587 = vmatpush1.msra.mxu0 %v569
    %588 = vmatprep.subr.mxu0 0.0
    %589 = vmatpush1.msra.mxu0 %v568
    %590 = vmatprep.subr.mxu0 0.0
    %591 = vmatpush1.msra.mxu0 %v567
    %592 = vmatprep.subr.mxu0 0.0
    %593 = vmatpush1.msra.mxu0 %v566
    %594 = vmatprep.subr.mxu0 0.0
    %595 = vmatpush1.msra.mxu0 %v565
    %596 = vmatprep.subr.mxu0 0.0
    %597 = vmatpush1.msra.mxu0 %v564
    %598 = vmatprep.subr.mxu0 0.0
    %599 = vmatpush1.msra.mxu0 %v563
    %600 = vmatprep.subr.mxu0 0.0
    %601 = vmatpush1.msra.mxu0 %v562
    %602 = vmatprep.subr.mxu0 0.0
    %603 = vmatpush1.msra.mxu0 %v561
    %604 = vmatprep.subr.mxu0 0.0
    %605 = vmatpush1.msra.mxu0 %v560
    %606 = vmatprep.subr.mxu0 0.0
    %607 = vmatpush1.msra.mxu0 %v559
    %608 = vmatprep.subr.mxu0 0.0
    %609 = vmatpush1.msra.mxu0 %v558
    %610 = vmatprep.subr.mxu0 0.0
    %611 = vmatpush1.msra.mxu0 %v557
    %612 = vmatprep.subr.mxu0 0.0
    %613 = vmatpush2.msra.mxu0 0.0
    %614 = vmatprep.subr.mxu0 0.0
    %615 = vmatpush2.msra.mxu0 0.0
    %616 = vmatprep.subr.mxu0 0.0
    %617 = vmatpush2.msra.mxu0 0.0
    %618 = vmatprep.subr.mxu0 0.0
    %619 = vmatpush2.msra.mxu0 0.0
    %620 = vmatprep.subr.mxu0 0.0
    %621 = vmatpush2.msra.mxu0 0.0
    %622 = vmatprep.subr.mxu0 0.0
    %623 = vmatpush2.msra.mxu0 0.0
    %624 = vmatprep.subr.mxu0 0.0
    %625 = vmatpush2.msra.mxu0 0.0
    %626 = vmatprep.subr.mxu0 0.0
    %627 = vmatpush2.msra.mxu0 0.0
    %628 = vmatprep.subr.mxu0 0.0
    %629 = vmatpush2.msra.mxu0 0.0
    %630 = vmatprep.subr.mxu0 0.0
    %631 = vmatpush2.msra.mxu0 0.0
    %632 = vmatprep.subr.mxu0 0.0
    %633 = vmatpush2.msra.mxu0 0.0
    %634 = vmatprep.subr.mxu0 0.0
    %635 = vmatpush2.msra.mxu0 0.0
    %636 = vmatprep.subr.mxu0 0.0
    %637 = vmatpush2.msra.mxu0 0.0
    %638 = vmatprep.subr.mxu0 0.0
    %639 = vmatpush2.msra.mxu0 0.0
    %640 = vmatprep.subr.mxu0 0.0
    %641 = vmatpush2.msra.mxu0 0.0
    %642 = vmatprep.subr.mxu0 0.0
    %643 = vmatpush2.msra.mxu0 0.0
    %644 = vmatprep.mubr.f32.mxu0 0.0
    %645 = vmatmul.mubr.f32.gmra.mxu0 %v539
    %v646 = vpop.f32.mrf.mxu0
    %v647 = vadd.f32 %v578, %v646
    %v648 = vpop.f32.mrf.mxu0
    %649 = vmatprep.mubr.f32.mxu0 0.0
    %650 = vmatmul.mubr.f32.gmra.mxu0 %v544
    %v651 = vpop.f32.mrf.mxu0
    %v652 = vadd.f32 %v578, %v651
    %v653 = vpop.f32.mrf.mxu0
    %654 = vmatprep.mubr.f32.mxu0 0.0
    %655 = vmatmul.mubr.f32.gmra.mxu0 %v549
    %v656 = vpop.f32.mrf.mxu0
    %v657 = vadd.f32 %v578, %v656
    %v658 = vpop.f32.mrf.mxu0
    %659 = vmatprep.mubr.f32.mxu0 0.0
    %660 = vmatmul.mubr.f32.gmra.mxu0 %v554
    %v661 = vpop.f32.mrf.mxu0
    %v662 = vadd.f32 %v578, %v661
    %v663 = vpop.f32.mrf.mxu0
    %664 = vdwg.mxu0
    %v665 = vadd.f32 %v647, %v652
    %v666 = vadd.f32 %v665, %v657
    %v667 = vadd.f32 %v666, %v662
    %v668 = vrot.slane %v667, 4
    %v669 = vadd.f32 %v667, %v668
    %v670 = vrot.slane %v669, 2
    %v671 = vadd.f32 %v669, %v670
    %v672 = vrot.slane %v671, 1
    %v673 = vadd.f32 %v671, %v672
    %v674 = vrcp.pop 32.0
    %v675 = vmul.f32 %v673, %v674
    %v676 = vsub.f32 %v647, %v675
    %v677 = vsub.f32 %v652, %v675
    %v678 = vsub.f32 %v657, %v675
    %v679 = vsub.f32 %v662, %v675
    %v680 = vmul.f32 %v676, %v676
    %v681 = vmul.f32 %v677, %v677
    %v682 = vmul.f32 %v678, %v678
    %v683 = vmul.f32 %v679, %v679
    %v684 = vadd.f32 %v680, %v681
    %v685 = vadd.f32 %v684, %v682
    %v686 = vadd.f32 %v685, %v683
    %v687 = vrot.slane %v686, 4
    %v688 = vadd.f32 %v686, %v687
    %v689 = vrot.slane %v688, 2
    %v690 = vadd.f32 %v688, %v689
    %v691 = vrot.slane %v690, 1
    %v692 = vadd.f32 %v690, %v691
    %v693 = vmul.f32 %v692, %v674
    %v694 = vadd.f32 %v693, 1e-05
    %v695 = vrsqrt.pop %v694
    %v696 = vmul.f32 %v676, %v695
    %v697 = vmul.f32 %v677, %v695
    %v698 = vmul.f32 %v678, %v695
    %v699 = vmul.f32 %v679, %v695
    %v700 = vmax.f32 %v696, 0.0
    %v701 = vmax.f32 %v697, 0.0
    %v702 = vmax.f32 %v698, 0.0
    %v703 = vmax.f32 %v699, 0.0
    %v704 = vld [vmem:[#allocation6] sm:$0xff]
    %v705 = vld [vmem:[#allocation6 + $0x8] sm:$0xff]
    %v706 = vld [vmem:[#allocation6 + $0x10] sm:$0xff]
    %v707 = vld [vmem:[#allocation6 + $0x18] sm:$0xff]
    %v708 = vld [vmem:[#allocation6 + $0x20] sm:$0xff]
    %v709 = vld [vmem:[#allocation6 + $0x28] sm:$0xff]
    %v710 = vld [vmem:[#allocation6 + $0x30] sm:$0xff]
    %v711 = vld [vmem:[#allocation6 + $0x38] sm:$0xff]
    %v712 = vld [vmem:[#allocation6 + $0x40] sm:$0xff]
    %v713 = vld [vmem:[#allocation6 + $0x48] sm:$0xff]
    %v714 = vld [vmem:[#allocation6 + $0x50] sm:$0xff]
    %v715 = vld [vmem:[#allocation6 + $0x58] sm:$0xff]
    %v716 = vld [vmem:[#allocation6 + $0x60] sm:$0xff]
    %v717 = vld [vmem:[#allocation6 + $0x68] sm:$0xff]
    %v718 = vld [vmem:[#allocation6 + $0x70] sm:$0xff]
    %v719 = vld [vmem:[#allocation6 + $0x78] sm:$0xff]
    %v720 = vld [vmem:[%s9] sm:$0x1]
    %v722 = vlaneseq
    %v723 = vshrl.u32 %v722, 7
    %v724 = vsub.s32 0, %v723
    %v725 = vrot.slane %v720, %v724
    %727 = vmatprep.subr.mxu0 0.0
    %728 = vmatpush1.msra.mxu0 %v719
    %729 = vmatprep.subr.mxu0 0.0
    %730 = vmatpush1.msra.mxu0 %v718
    %731 = vmatprep.subr.mxu0 0.0
    %732 = vmatpush1.msra.mxu0 %v717
    %733 = vmatprep.subr.mxu0 0.0
    %734 = vmatpush1.msra.mxu0 %v716
    %735 = vmatprep.subr.mxu0 0.0
    %736 = vmatpush1.msra.mxu0 %v715
    %737 = vmatprep.subr.mxu0 0.0
    %738 = vmatpush1.msra.mxu0 %v714
    %739 = vmatprep.subr.mxu0 0.0
    %740 = vmatpush1.msra.mxu0 %v713
    %741 = vmatprep.subr.mxu0 0.0
    %742 = vmatpush1.msra.mxu0 %v712
    %743 = vmatprep.subr.mxu0 0.0
    %744 = vmatpush1.msra.mxu0 %v711
    %745 = vmatprep.subr.mxu0 0.0
    %746 = vmatpush1.msra.mxu0 %v710
    %747 = vmatprep.subr.mxu0 0.0
    %748 = vmatpush1.msra.mxu0 %v709
    %749 = vmatprep.subr.mxu0 0.0
    %750 = vmatpush1.msra.mxu0 %v708
    %751 = vmatprep.subr.mxu0 0.0
    %752 = vmatpush1.msra.mxu0 %v707
    %753 = vmatprep.subr.mxu0 0.0
    %754 = vmatpush1.msra.mxu0 %v706
    %755 = vmatprep.subr.mxu0 0.0
    %756 = vmatpush1.msra.mxu0 %v705
    %757 = vmatprep.subr.mxu0 0.0
    %758 = vmatpush1.msra.mxu0 %v704
    %759 = vmatprep.subr.mxu0 0.0
    %760 = vmatpush2.msra.mxu0 0.0
    %761 = vmatprep.subr.mxu0 0.0
    %762 = vmatpush2.msra.mxu0 0.0
    %763 = vmatprep.subr.mxu0 0.0
    %764 = vmatpush2.msra.mxu0 0.0
    %765 = vmatprep.subr.mxu0 0.0
    %766 = vmatpush2.msra.mxu0 0.0
    %767 = vmatprep.subr.mxu0 0.0
    %768 = vmatpush2.msra.mxu0 0.0
    %769 = vmatprep.subr.mxu0 0.0
    %770 = vmatpush2.msra.mxu0 0.0
    %771 = vmatprep.subr.mxu0 0.0
    %772 = vmatpush2.msra.mxu0 0.0
    %773 = vmatprep.subr.mxu0 0.0
    %774 = vmatpush2.msra.mxu0 0.0
    %775 = vmatprep.subr.mxu0 0.0
    %776 = vmatpush2.msra.mxu0 0.0
    %777 = vmatprep.subr.mxu0 0.0
    %778 = vmatpush2.msra.mxu0 0.0
    %779 = vmatprep.subr.mxu0 0.0
    %780 = vmatpush2.msra.mxu0 0.0
    %781 = vmatprep.subr.mxu0 0.0
    %782 = vmatpush2.msra.mxu0 0.0
    %783 = vmatprep.subr.mxu0 0.0
    %784 = vmatpush2.msra.mxu0 0.0
    %785 = vmatprep.subr.mxu0 0.0
    %786 = vmatpush2.msra.mxu0 0.0
    %787 = vmatprep.subr.mxu0 0.0
    %788 = vmatpush2.msra.mxu0 0.0
    %789 = vmatprep.subr.mxu0 0.0
    %790 = vmatpush2.msra.mxu0 0.0
    %791 = vmatprep.mubr.f32.mxu0 0.0
    %792 = vmatmul.mubr.f32.gmra.mxu0 %v700
    %v793 = vpop.f32.mrf.mxu0
    %v794 = vadd.f32 %v725, %v793
    %v795 = vpop.f32.mrf.mxu0
    %796 = vmatprep.mubr.f32.mxu0 0.0
    %797 = vmatmul.mubr.f32.gmra.mxu0 %v701
    %v798 = vpop.f32.mrf.mxu0
    %v799 = vadd.f32 %v725, %v798
    %v800 = vpop.f32.mrf.mxu0
    %801 = vmatprep.mubr.f32.mxu0 0.0
    %802 = vmatmul.mubr.f32.gmra.mxu0 %v702
    %v803 = vpop.f32.mrf.mxu0
    %v804 = vadd.f32 %v725, %v803
    %v805 = vpop.f32.mrf.mxu0
    %806 = vmatprep.mubr.f32.mxu0 0.0
    %807 = vmatmul.mubr.f32.gmra.mxu0 %v703
    %v808 = vpop.f32.mrf.mxu0
    %v809 = vadd.f32 %v725, %v808
    %v810 = vpop.f32.mrf.mxu0
    %811 = vdwg.mxu0
    %v812 = vadd.f32 %v794, %v799
    %v813 = vadd.f32 %v812, %v804
    %v814 = vadd.f32 %v813, %v809
    %v815 = vrot.slane %v814, 4
    %v816 = vadd.f32 %v814, %v815
    %v817 = vrot.slane %v816, 2
    %v818 = vadd.f32 %v816, %v817
    %v819 = vrot.slane %v818, 1
    %v820 = vadd.f32 %v818, %v819
    %v821 = vmul.f32 %v820, %v674
    %v822 = vsub.f32 %v794, %v821
    %v823 = vsub.f32 %v799, %v821
    %v824 = vsub.f32 %v804, %v821
    %v825 = vsub.f32 %v809, %v821
    %v826 = vmul.f32 %v822, %v822
    %v827 = vmul.f32 %v823, %v823
    %v828 = vmul.f32 %v824, %v824
    %v829 = vmul.f32 %v825, %v825
    %v830 = vadd.f32 %v826, %v827
    %v831 = vadd.f32 %v830, %v828
    %v832 = vadd.f32 %v831, %v829
    %v833 = vrot.slane %v832, 4
    %v834 = vadd.f32 %v832, %v833
    %v835 = vrot.slane %v834, 2
    %v836 = vadd.f32 %v834, %v835
    %v837 = vrot.slane %v836, 1
    %v838 = vadd.f32 %v836, %v837
    %v839 = vmul.f32 %v838, %v674
    %v840 = vadd.f32 %v839, 1e-05
    %v841 = vrsqrt.pop %v840
    %v842 = vmul.f32 %v822, %v841
    %v843 = vmul.f32 %v823, %v841
    %v844 = vmul.f32 %v824, %v841
    %v845 = vmul.f32 %v825, %v841
    %v846 = vmax.f32 %v842, 0.0
    %v847 = vmax.f32 %v843, 0.0
    %v848 = vmax.f32 %v844, 0.0
    %v849 = vmax.f32 %v845, 0.0
    %s850 = sld [smem:[#allocation8 + $0x1]]
    %s851 = scalar_lea.vmem %s3, 128
    %v852 = vld [vmem:[%s851] sm:$0xff]
    %v853 = vld [vmem:[%s851 + $0x8] sm:$0xff]
    %v854 = vld [vmem:[%s851 + $0x10] sm:$0xff]
    %v855 = vld [vmem:[%s851 + $0x18] sm:$0xff]
    %v856 = vld [vmem:[%s851 + $0x20] sm:$0xff]
    %v857 = vld [vmem:[%s851 + $0x28] sm:$0xff]
    %v858 = vld [vmem:[%s851 + $0x30] sm:$0xff]
    %v859 = vld [vmem:[%s851 + $0x38] sm:$0xff]
    %v860 = vld [vmem:[%s851 + $0x40] sm:$0xff]
    %v861 = vld [vmem:[%s851 + $0x48] sm:$0xff]
    %v862 = vld [vmem:[%s851 + $0x50] sm:$0xff]
    %v863 = vld [vmem:[%s851 + $0x58] sm:$0xff]
    %v864 = vld [vmem:[%s851 + $0x60] sm:$0xff]
    %v865 = vld [vmem:[%s851 + $0x68] sm:$0xff]
    %v866 = vld [vmem:[%s851 + $0x70] sm:$0xff]
    %v867 = vld [vmem:[%s851 + $0x78] sm:$0xff]
    %868 = vmatprep.subr.mxu0 0.0
    %869 = vmatpush1.msra.mxu0 %v867
    %870 = vmatprep.subr.mxu0 0.0
    %871 = vmatpush1.msra.mxu0 %v866
    %872 = vmatprep.subr.mxu0 0.0
    %873 = vmatpush1.msra.mxu0 %v865
    %874 = vmatprep.subr.mxu0 0.0
    %875 = vmatpush1.msra.mxu0 %v864
    %876 = vmatprep.subr.mxu0 0.0
    %877 = vmatpush1.msra.mxu0 %v863
    %878 = vmatprep.subr.mxu0 0.0
    %879 = vmatpush1.msra.mxu0 %v862
    %880 = vmatprep.subr.mxu0 0.0
    %881 = vmatpush1.msra.mxu0 %v861
    %882 = vmatprep.subr.mxu0 0.0
    %883 = vmatpush1.msra.mxu0 %v860
    %884 = vmatprep.subr.mxu0 0.0
    %885 = vmatpush1.msra.mxu0 %v859
    %886 = vmatprep.subr.mxu0 0.0
    %887 = vmatpush1.msra.mxu0 %v858
    %888 = vmatprep.subr.mxu0 0.0
    %889 = vmatpush1.msra.mxu0 %v857
    %890 = vmatprep.subr.mxu0 0.0
    %891 = vmatpush1.msra.mxu0 %v856
    %892 = vmatprep.subr.mxu0 0.0
    %893 = vmatpush1.msra.mxu0 %v855
    %894 = vmatprep.subr.mxu0 0.0
    %895 = vmatpush1.msra.mxu0 %v854
    %896 = vmatprep.subr.mxu0 0.0
    %897 = vmatpush1.msra.mxu0 %v853
    %898 = vmatprep.subr.mxu0 0.0
    %899 = vmatpush1.msra.mxu0 %v852
    %900 = vmatprep.subr.mxu0 0.0
    %901 = vmatpush2.msra.mxu0 0.0
    %902 = vmatprep.subr.mxu0 0.0
    %903 = vmatpush2.msra.mxu0 0.0
    %904 = vmatprep.subr.mxu0 0.0
    %905 = vmatpush2.msra.mxu0 0.0
    %906 = vmatprep.subr.mxu0 0.0
    %907 = vmatpush2.msra.mxu0 0.0
    %908 = vmatprep.subr.mxu0 0.0
    %909 = vmatpush2.msra.mxu0 0.0
    %910 = vmatprep.subr.mxu0 0.0
    %911 = vmatpush2.msra.mxu0 0.0
    %912 = vmatprep.subr.mxu0 0.0
    %913 = vmatpush2.msra.mxu0 0.0
    %914 = vmatprep.subr.mxu0 0.0
    %915 = vmatpush2.msra.mxu0 0.0
    %916 = vmatprep.subr.mxu0 0.0
    %917 = vmatpush2.msra.mxu0 0.0
    %918 = vmatprep.subr.mxu0 0.0
    %919 = vmatpush2.msra.mxu0 0.0
    %920 = vmatprep.subr.mxu0 0.0
    %921 = vmatpush2.msra.mxu0 0.0
    %922 = vmatprep.subr.mxu0 0.0
    %923 = vmatpush2.msra.mxu0 0.0
    %924 = vmatprep.subr.mxu0 0.0
    %925 = vmatpush2.msra.mxu0 0.0
    %926 = vmatprep.subr.mxu0 0.0
    %927 = vmatpush2.msra.mxu0 0.0
    %928 = vmatprep.subr.mxu0 0.0
    %929 = vmatpush2.msra.mxu0 0.0
    %930 = vmatprep.subr.mxu0 0.0
    %931 = vmatpush2.msra.mxu0 0.0
    %932 = vmatprep.mubr.f32.mxu0 0.0
    %933 = vmatmul.mubr.f32.gmra.mxu0 %v846
    %v934 = vpop.f32.mrf.mxu0
    %v935 = vadd.f32 0.0, %v934
    %v936 = vpop.f32.mrf.mxu0
    %937 = vmatprep.mubr.f32.mxu0 0.0
    %938 = vmatmul.mubr.f32.gmra.mxu0 %v847
    %v939 = vpop.f32.mrf.mxu0
    %v940 = vadd.f32 0.0, %v939
    %v941 = vpop.f32.mrf.mxu0
    %942 = vmatprep.mubr.f32.mxu0 0.0
    %943 = vmatmul.mubr.f32.gmra.mxu0 %v848
    %v944 = vpop.f32.mrf.mxu0
    %v945 = vadd.f32 0.0, %v944
    %v946 = vpop.f32.mrf.mxu0
    %947 = vmatprep.mubr.f32.mxu0 0.0
    %948 = vmatmul.mubr.f32.gmra.mxu0 %v849
    %v949 = vpop.f32.mrf.mxu0
    %v950 = vadd.f32 0.0, %v949
    %v951 = vpop.f32.mrf.mxu0
    %952 = vdwg.mxu0
    %s953 = scalar_lea.vmem %s4, 128
    %v954 = vld [vmem:[%s953] sm:$0xff]
    %v955 = vld [vmem:[%s953 + $0x8] sm:$0xff]
    %v956 = vld [vmem:[%s953 + $0x10] sm:$0xff]
    %v957 = vld [vmem:[%s953 + $0x18] sm:$0xff]
    %v958 = vld [vmem:[%s953 + $0x20] sm:$0xff]
    %v959 = vld [vmem:[%s953 + $0x28] sm:$0xff]
    %v960 = vld [vmem:[%s953 + $0x30] sm:$0xff]
    %v961 = vld [vmem:[%s953 + $0x38] sm:$0xff]
    %v962 = vld [vmem:[%s953 + $0x40] sm:$0xff]
    %v963 = vld [vmem:[%s953 + $0x48] sm:$0xff]
    %v964 = vld [vmem:[%s953 + $0x50] sm:$0xff]
    %v965 = vld [vmem:[%s953 + $0x58] sm:$0xff]
    %v966 = vld [vmem:[%s953 + $0x60] sm:$0xff]
    %v967 = vld [vmem:[%s953 + $0x68] sm:$0xff]
    %v968 = vld [vmem:[%s953 + $0x70] sm:$0xff]
    %v969 = vld [vmem:[%s953 + $0x78] sm:$0xff]
    %970 = vmatprep.subr.mxu0 0.0
    %971 = vmatpush1.msra.mxu0 %v969
    %972 = vmatprep.subr.mxu0 0.0
    %973 = vmatpush1.msra.mxu0 %v968
    %974 = vmatprep.subr.mxu0 0.0
    %975 = vmatpush1.msra.mxu0 %v967
    %976 = vmatprep.subr.mxu0 0.0
    %977 = vmatpush1.msra.mxu0 %v966
    %978 = vmatprep.subr.mxu0 0.0
    %979 = vmatpush1.msra.mxu0 %v965
    %980 = vmatprep.subr.mxu0 0.0
    %981 = vmatpush1.msra.mxu0 %v964
    %982 = vmatprep.subr.mxu0 0.0
    %983 = vmatpush1.msra.mxu0 %v963
    %984 = vmatprep.subr.mxu0 0.0
    %985 = vmatpush1.msra.mxu0 %v962
    %986 = vmatprep.subr.mxu0 0.0
    %987 = vmatpush1.msra.mxu0 %v961
    %988 = vmatprep.subr.mxu0 0.0
    %989 = vmatpush1.msra.mxu0 %v960
    %990 = vmatprep.subr.mxu0 0.0
    %991 = vmatpush1.msra.mxu0 %v959
    %992 = vmatprep.subr.mxu0 0.0
    %993 = vmatpush1.msra.mxu0 %v958
    %994 = vmatprep.subr.mxu0 0.0
    %995 = vmatpush1.msra.mxu0 %v957
    %996 = vmatprep.subr.mxu0 0.0
    %997 = vmatpush1.msra.mxu0 %v956
    %998 = vmatprep.subr.mxu0 0.0
    %999 = vmatpush1.msra.mxu0 %v955
    %1000 = vmatprep.subr.mxu0 0.0
    %1001 = vmatpush1.msra.mxu0 %v954
    %1002 = vmatprep.subr.mxu0 0.0
    %1003 = vmatpush2.msra.mxu0 0.0
    %1004 = vmatprep.subr.mxu0 0.0
    %1005 = vmatpush2.msra.mxu0 0.0
    %1006 = vmatprep.subr.mxu0 0.0
    %1007 = vmatpush2.msra.mxu0 0.0
    %1008 = vmatprep.subr.mxu0 0.0
    %1009 = vmatpush2.msra.mxu0 0.0
    %1010 = vmatprep.subr.mxu0 0.0
    %1011 = vmatpush2.msra.mxu0 0.0
    %1012 = vmatprep.subr.mxu0 0.0
    %1013 = vmatpush2.msra.mxu0 0.0
    %1014 = vmatprep.subr.mxu0 0.0
    %1015 = vmatpush2.msra.mxu0 0.0
    %1016 = vmatprep.subr.mxu0 0.0
    %1017 = vmatpush2.msra.mxu0 0.0
    %1018 = vmatprep.subr.mxu0 0.0
    %1019 = vmatpush2.msra.mxu0 0.0
    %1020 = vmatprep.subr.mxu0 0.0
    %1021 = vmatpush2.msra.mxu0 0.0
    %1022 = vmatprep.subr.mxu0 0.0
    %1023 = vmatpush2.msra.mxu0 0.0
    %1024 = vmatprep.subr.mxu0 0.0
    %1025 = vmatpush2.msra.mxu0 0.0
    %1026 = vmatprep.subr.mxu0 0.0
    %1027 = vmatpush2.msra.mxu0 0.0
    %1028 = vmatprep.subr.mxu0 0.0
    %1029 = vmatpush2.msra.mxu0 0.0
    %1030 = vmatprep.subr.mxu0 0.0
    %1031 = vmatpush2.msra.mxu0 0.0
    %1032 = vmatprep.subr.mxu0 0.0
    %1033 = vmatpush2.msra.mxu0 0.0
    %1034 = vmatprep.mubr.f32.mxu0 0.0
    %1035 = vmatmul.mubr.f32.gmra.mxu0 %v935
    %v1036 = vpop.f32.mrf.mxu0
    %v1037 = vadd.f32 0.0, %v1036
    %v1038 = vpop.f32.mrf.mxu0
    %1039 = vmatprep.mubr.f32.mxu0 0.0
    %1040 = vmatmul.mubr.f32.gmra.mxu0 %v940
    %v1041 = vpop.f32.mrf.mxu0
    %v1042 = vadd.f32 0.0, %v1041
    %v1043 = vpop.f32.mrf.mxu0
    %1044 = vmatprep.mubr.f32.mxu0 0.0
    %1045 = vmatmul.mubr.f32.gmra.mxu0 %v945
    %v1046 = vpop.f32.mrf.mxu0
    %v1047 = vadd.f32 0.0, %v1046
    %v1048 = vpop.f32.mrf.mxu0
    %1049 = vmatprep.mubr.f32.mxu0 0.0
    %1050 = vmatmul.mubr.f32.gmra.mxu0 %v950
    %v1051 = vpop.f32.mrf.mxu0
    %v1052 = vadd.f32 0.0, %v1051
    %v1053 = vpop.f32.mrf.mxu0
    %1054 = vdwg.mxu0
    %s1055 = scalar_lea.vmem %s5, 1
    %v1056 = vld [vmem:[%s1055] sm:$0x1]
    %1057 = vmatprep.subr.mxu0 0.0
    %1058 = vmatpush1.xpose.msra.mxu0 0.0
    %1059 = vmatprep.subr.mxu0 0.0
    %1060 = vmatpush1.xpose.msra.mxu0 0.0
    %1061 = vmatprep.subr.mxu0 0.0
    %1062 = vmatpush1.xpose.msra.mxu0 0.0
    %1063 = vmatprep.subr.mxu0 0.0
    %1064 = vmatpush1.xpose.msra.mxu0 0.0
    %1065 = vmatprep.subr.mxu0 0.0
    %1066 = vmatpush1.xpose.msra.mxu0 0.0
    %1067 = vmatprep.subr.mxu0 0.0
    %1068 = vmatpush1.xpose.msra.mxu0 0.0
    %1069 = vmatprep.subr.mxu0 0.0
    %1070 = vmatpush1.xpose.msra.mxu0 0.0
    %1071 = vmatprep.subr.mxu0 0.0
    %1072 = vmatpush1.xpose.msra.mxu0 0.0
    %1073 = vmatprep.subr.mxu0 0.0
    %1074 = vmatpush1.xpose.msra.mxu0 0.0
    %1075 = vmatprep.subr.mxu0 0.0
    %1076 = vmatpush1.xpose.msra.mxu0 0.0
    %1077 = vmatprep.subr.mxu0 0.0
    %1078 = vmatpush1.xpose.msra.mxu0 0.0
    %1079 = vmatprep.subr.mxu0 0.0
    %1080 = vmatpush1.xpose.msra.mxu0 0.0
    %1081 = vmatprep.subr.mxu0 0.0
    %1082 = vmatpush1.xpose.msra.mxu0 %v950
    %1083 = vmatprep.subr.mxu0 0.0
    %1084 = vmatpush1.xpose.msra.mxu0 %v945
    %1085 = vmatprep.subr.mxu0 0.0
    %1086 = vmatpush1.xpose.msra.mxu0 %v940
    %1087 = vmatprep.subr.mxu0 0.0
    %1088 = vmatpush1.xpose.msra.mxu0 %v935
    %1089 = vmatprep.subr.mxu0 0.0
    %1090 = vmatpush2.xpose.msra.mxu0 0.0
    %1091 = vmatprep.subr.mxu0 0.0
    %1092 = vmatpush2.xpose.msra.mxu0 0.0
    %1093 = vmatprep.subr.mxu0 0.0
    %1094 = vmatpush2.xpose.msra.mxu0 0.0
    %1095 = vmatprep.subr.mxu0 0.0
    %1096 = vmatpush2.xpose.msra.mxu0 0.0
    %1097 = vmatprep.subr.mxu0 0.0
    %1098 = vmatpush2.xpose.msra.mxu0 0.0
    %1099 = vmatprep.subr.mxu0 0.0
    %1100 = vmatpush2.xpose.msra.mxu0 0.0
    %1101 = vmatprep.subr.mxu0 0.0
    %1102 = vmatpush2.xpose.msra.mxu0 0.0
    %1103 = vmatprep.subr.mxu0 0.0
    %1104 = vmatpush2.xpose.msra.mxu0 0.0
    %1105 = vmatprep.subr.mxu0 0.0
    %1106 = vmatpush2.xpose.msra.mxu0 0.0
    %1107 = vmatprep.subr.mxu0 0.0
    %1108 = vmatpush2.xpose.msra.mxu0 0.0
    %1109 = vmatprep.subr.mxu0 0.0
    %1110 = vmatpush2.xpose.msra.mxu0 0.0
    %1111 = vmatprep.subr.mxu0 0.0
    %1112 = vmatpush2.xpose.msra.mxu0 0.0
    %1113 = vmatprep.subr.mxu0 0.0
    %1114 = vmatpush2.xpose.msra.mxu0 0.0
    %1115 = vmatprep.subr.mxu0 0.0
    %1116 = vmatpush2.xpose.msra.mxu0 0.0
    %1117 = vmatprep.subr.mxu0 0.0
    %1118 = vmatpush2.xpose.msra.mxu0 0.0
    %1119 = vmatprep.subr.mxu0 0.0
    %1120 = vmatpush2.xpose.msra.mxu0 0.0
    %1121 = vmatprep.mubr.f32.mxu0 0.0
    %1122 = vmatmul.mubr.f32.gmra.mxu0 %v1056
    %v1123 = vpop.f32.mrf.mxu0
    %v1124 = vadd.f32 0.0, %v1123
    %v1125 = vpop.f32.mrf.mxu0
    %1126 = vdwg.mxu0
    %1128 = vset.pattern.permute.xlu0 0
    %1129 = vperm.xlu0 %1128, %v1037
    %v1130 = vpop.permute.xlu0 %1129
    %1133 = vset.pattern.permute.xlu0 0
    %1134 = vperm.xlu0 %1133, %v1042
    %v1135 = vpop.permute.xlu0 %1134
    %1138 = vset.pattern.permute.xlu0 0
    %1139 = vperm.xlu0 %1138, %v1047
    %v1140 = vpop.permute.xlu0 %1139
    %1143 = vset.pattern.permute.xlu0 0
    %1144 = vperm.xlu0 %1143, %v1052
    %v1145 = vpop.permute.xlu0 %1144
    %v1147 = vlaneseq
    %v1148 = vshrl.u32 %v1147, 7
    %v1149 = vsub.s32 0, %v1148
    %v1150 = vrot.slane %v1124, %v1149
    %v1151 = vadd.f32 %v1130, %v1150
    %v1152 = vadd.f32 %v1135, %v1150
    %v1153 = vadd.f32 %v1140, %v1150
    %v1154 = vadd.f32 %v1145, %v1150
    %vm1155 = vcmp.gt.f32.partialorder %v1151, 0.0
    %vm1156 = vcmp.gt.f32.partialorder %v1152, 0.0
    %vm1157 = vcmp.gt.f32.partialorder %v1153, 0.0
    %vm1158 = vcmp.gt.f32.partialorder %v1154, 0.0
    %v1159 = vmul.f32 %v1151, 0.01
    %v1160 = vmul.f32 %v1152, 0.01
    %v1161 = vmul.f32 %v1153, 0.01
    %v1162 = vmul.f32 %v1154, 0.01
    %v1163 = vsel %vm1155, %v1151, %v1159
    %v1164 = vsel %vm1156, %v1152, %v1160
    %v1165 = vsel %vm1157, %v1153, %v1161
    %v1166 = vsel %vm1158, %v1154, %v1162
    %v1167 = vsel %vm405, %v1163, -inf
    %1168 = vmax.xlane.f32.xlu0 %v1167
    %v1169 = vpop.xlane.xlu0 %1168
    %v1170 = vsel %vm405, %v1164, -inf
    %1171 = vmax.xlane.f32.xlu0 %v1170
    %v1172 = vpop.xlane.xlu0 %1171
    %v1173 = vsel %vm405, %v1165, -inf
    %1174 = vmax.xlane.f32.xlu0 %v1173
    %v1175 = vpop.xlane.xlu0 %1174
    %v1176 = vsel %vm405, %v1166, -inf
    %1177 = vmax.xlane.f32.xlu0 %v1176
    %v1178 = vpop.xlane.xlu0 %1177
    %v1179 = vsub.f32 %v1163, %v1169
    %v1180 = vsub.f32 %v1164, %v1172
    %v1181 = vsub.f32 %v1165, %v1175
    %v1182 = vsub.f32 %v1166, %v1178
    %v1183 = vmul.f32 %v1179, 1.442695
    %v1184 = vpow.pop %v1183
    %v1185 = vmul.f32 %v1180, 1.442695
    %v1186 = vpow.pop %v1185
    %v1187 = vmul.f32 %v1181, 1.442695
    %v1188 = vpow.pop %v1187
    %v1189 = vmul.f32 %v1182, 1.442695
    %v1190 = vpow.pop %v1189
    %v1191 = vsel %vm405, %v1184, 0.0
    %1192 = vadd.xlane.f32.xlu0 %v1191
    %v1193 = vpop.xlane.xlu0 %1192
    %v1194 = vsel %vm405, %v1186, 0.0
    %1195 = vadd.xlane.f32.xlu0 %v1194
    %v1196 = vpop.xlane.xlu0 %1195
    %v1197 = vsel %vm405, %v1188, 0.0
    %1198 = vadd.xlane.f32.xlu0 %v1197
    %v1199 = vpop.xlane.xlu0 %1198
    %v1200 = vsel %vm405, %v1190, 0.0
    %1201 = vadd.xlane.f32.xlu0 %v1200
    %v1202 = vpop.xlane.xlu0 %1201
    %v1203 = vrcp.pop %v1193
    %v1204 = vrcp.pop %v1196
    %v1205 = vrcp.pop %v1199
    %v1206 = vrcp.pop %v1202
    %v1207 = vmul.f32 %v1184, %v1203
    %v1208 = vmul.f32 %v1186, %v1204
    %v1209 = vmul.f32 %v1188, %v1205
    %v1210 = vmul.f32 %v1190, %v1206
    %v1211 = vmul.f32 %v87, %v1207
    %v1212 = vmul.f32 %v88, %v1208
    %v1213 = vmul.f32 %v89, %v1209
    %v1214 = vmul.f32 %v90, %v1210
    %s1215 = sadd.f32 %s850, 1.0
    %v1216 = vstv %s1215
    %v1217 = vmul.f32 %v1216, %v846
    %v1218 = vmul.f32 %v1216, %v847
    %v1219 = vmul.f32 %v1216, %v848
    %v1220 = vmul.f32 %v1216, %v849
    %v1222 = vsel %vm405, %v1211, 0
    %v1225 = vsel %vm405, %v1212, 0
    %v1228 = vsel %vm405, %v1213, 0
    %v1231 = vsel %vm405, %v1214, 0
    %1233 = vmatprep.subr.mxu0 0.0
    %1234 = vmatpush1.msra.mxu0 0.0
    %1235 = vmatprep.subr.mxu0 0.0
    %1236 = vmatpush1.msra.mxu0 0.0
    %1237 = vmatprep.subr.mxu0 0.0
    %1238 = vmatpush1.msra.mxu0 0.0
    %1239 = vmatprep.subr.mxu0 0.0
    %1240 = vmatpush1.msra.mxu0 0.0
    %1241 = vmatprep.subr.mxu0 0.0
    %1242 = vmatpush1.msra.mxu0 0.0
    %1243 = vmatprep.subr.mxu0 0.0
    %1244 = vmatpush1.msra.mxu0 0.0
    %1245 = vmatprep.subr.mxu0 0.0
    %1246 = vmatpush1.msra.mxu0 0.0
    %1247 = vmatprep.subr.mxu0 0.0
    %1248 = vmatpush1.msra.mxu0 0.0
    %1249 = vmatprep.subr.mxu0 0.0
    %1250 = vmatpush1.msra.mxu0 0.0
    %1251 = vmatprep.subr.mxu0 0.0
    %1252 = vmatpush1.msra.mxu0 0.0
    %1253 = vmatprep.subr.mxu0 0.0
    %1254 = vmatpush1.msra.mxu0 0.0
    %1255 = vmatprep.subr.mxu0 0.0
    %1256 = vmatpush1.msra.mxu0 0.0
    %1257 = vmatprep.subr.mxu0 0.0
    %1258 = vmatpush1.msra.mxu0 %v849
    %1259 = vmatprep.subr.mxu0 0.0
    %1260 = vmatpush1.msra.mxu0 %v848
    %1261 = vmatprep.subr.mxu0 0.0
    %1262 = vmatpush1.msra.mxu0 %v847
    %1263 = vmatprep.subr.mxu0 0.0
    %1264 = vmatpush1.msra.mxu0 %v846
    %1265 = vmatprep.subr.mxu0 0.0
    %1266 = vmatpush2.msra.mxu0 0.0
    %1267 = vmatprep.subr.mxu0 0.0
    %1268 = vmatpush2.msra.mxu0 0.0
    %1269 = vmatprep.subr.mxu0 0.0
    %1270 = vmatpush2.msra.mxu0 0.0
    %1271 = vmatprep.subr.mxu0 0.0
    %1272 = vmatpush2.msra.mxu0 0.0
    %1273 = vmatprep.subr.mxu0 0.0
    %1274 = vmatpush2.msra.mxu0 0.0
    %1275 = vmatprep.subr.mxu0 0.0
    %1276 = vmatpush2.msra.mxu0 0.0
    %1277 = vmatprep.subr.mxu0 0.0
    %1278 = vmatpush2.msra.mxu0 0.0
    %1279 = vmatprep.subr.mxu0 0.0
    %1280 = vmatpush2.msra.mxu0 0.0
    %1281 = vmatprep.subr.mxu0 0.0
    %1282 = vmatpush2.msra.mxu0 0.0
    %1283 = vmatprep.subr.mxu0 0.0
    %1284 = vmatpush2.msra.mxu0 0.0
    %1285 = vmatprep.subr.mxu0 0.0
    %1286 = vmatpush2.msra.mxu0 0.0
    %1287 = vmatprep.subr.mxu0 0.0
    %1288 = vmatpush2.msra.mxu0 0.0
    %1289 = vmatprep.subr.mxu0 0.0
    %1290 = vmatpush2.msra.mxu0 0.0
    %1291 = vmatprep.subr.mxu0 0.0
    %1292 = vmatpush2.msra.mxu0 0.0
    %1293 = vmatprep.subr.mxu0 0.0
    %1294 = vmatpush2.msra.mxu0 0.0
    %1295 = vmatprep.subr.mxu0 0.0
    %1296 = vmatpush2.msra.mxu0 0.0
    %1297 = vmatprep.mubr.f32.mxu0 0.0
    %1298 = vmatmul.mubr.f32.gmra.mxu0 %v1222
    %v1299 = vpop.f32.mrf.mxu0
    %v1300 = vadd.f32 %v1217, %v1299
    %v1301 = vpop.f32.mrf.mxu0
    %1302 = vmatprep.mubr.f32.mxu0 0.0
    %1303 = vmatmul.mubr.f32.gmra.mxu0 %v1225
    %v1304 = vpop.f32.mrf.mxu0
    %v1305 = vadd.f32 %v1218, %v1304
    %v1306 = vpop.f32.mrf.mxu0
    %1307 = vmatprep.mubr.f32.mxu0 0.0
    %1308 = vmatmul.mubr.f32.gmra.mxu0 %v1228
    %v1309 = vpop.f32.mrf.mxu0
    %v1310 = vadd.f32 %v1219, %v1309
    %v1311 = vpop.f32.mrf.mxu0
    %1312 = vmatprep.mubr.f32.mxu0 0.0
    %1313 = vmatmul.mubr.f32.gmra.mxu0 %v1231
    %v1314 = vpop.f32.mrf.mxu0
    %v1315 = vadd.f32 %v1220, %v1314
    %v1316 = vpop.f32.mrf.mxu0
    %1317 = vdwg.mxu0
    %s1318 = scalar_lea.vmem [#allocation2], 128
    %v1319 = vld [vmem:[%s1318] sm:$0xff]
    %v1320 = vld [vmem:[%s1318 + $0x8] sm:$0xff]
    %v1321 = vld [vmem:[%s1318 + $0x10] sm:$0xff]
    %v1322 = vld [vmem:[%s1318 + $0x18] sm:$0xff]
    %v1323 = vld [vmem:[%s1318 + $0x20] sm:$0xff]
    %v1324 = vld [vmem:[%s1318 + $0x28] sm:$0xff]
    %v1325 = vld [vmem:[%s1318 + $0x30] sm:$0xff]
    %v1326 = vld [vmem:[%s1318 + $0x38] sm:$0xff]
    %v1327 = vld [vmem:[%s1318 + $0x40] sm:$0xff]
    %v1328 = vld [vmem:[%s1318 + $0x48] sm:$0xff]
    %v1329 = vld [vmem:[%s1318 + $0x50] sm:$0xff]
    %v1330 = vld [vmem:[%s1318 + $0x58] sm:$0xff]
    %v1331 = vld [vmem:[%s1318 + $0x60] sm:$0xff]
    %v1332 = vld [vmem:[%s1318 + $0x68] sm:$0xff]
    %v1333 = vld [vmem:[%s1318 + $0x70] sm:$0xff]
    %v1334 = vld [vmem:[%s1318 + $0x78] sm:$0xff]
    %s1335 = scalar_lea.vmem %s7, 1
    %v1336 = vld [vmem:[%s1335] sm:$0x1]
    %v1338 = vlaneseq
    %v1339 = vshrl.u32 %v1338, 7
    %v1340 = vsub.s32 0, %v1339
    %v1341 = vrot.slane %v1336, %v1340
    %1343 = vmatprep.subr.mxu0 0.0
    %1344 = vmatpush1.msra.mxu0 %v1334
    %1345 = vmatprep.subr.mxu0 0.0
    %1346 = vmatpush1.msra.mxu0 %v1333
    %1347 = vmatprep.subr.mxu0 0.0
    %1348 = vmatpush1.msra.mxu0 %v1332
    %1349 = vmatprep.subr.mxu0 0.0
    %1350 = vmatpush1.msra.mxu0 %v1331
    %1351 = vmatprep.subr.mxu0 0.0
    %1352 = vmatpush1.msra.mxu0 %v1330
    %1353 = vmatprep.subr.mxu0 0.0
    %1354 = vmatpush1.msra.mxu0 %v1329
    %1355 = vmatprep.subr.mxu0 0.0
    %1356 = vmatpush1.msra.mxu0 %v1328
    %1357 = vmatprep.subr.mxu0 0.0
    %1358 = vmatpush1.msra.mxu0 %v1327
    %1359 = vmatprep.subr.mxu0 0.0
    %1360 = vmatpush1.msra.mxu0 %v1326
    %1361 = vmatprep.subr.mxu0 0.0
    %1362 = vmatpush1.msra.mxu0 %v1325
    %1363 = vmatprep.subr.mxu0 0.0
    %1364 = vmatpush1.msra.mxu0 %v1324
    %1365 = vmatprep.subr.mxu0 0.0
    %1366 = vmatpush1.msra.mxu0 %v1323
    %1367 = vmatprep.subr.mxu0 0.0
    %1368 = vmatpush1.msra.mxu0 %v1322
    %1369 = vmatprep.subr.mxu0 0.0
    %1370 = vmatpush1.msra.mxu0 %v1321
    %1371 = vmatprep.subr.mxu0 0.0
    %1372 = vmatpush1.msra.mxu0 %v1320
    %1373 = vmatprep.subr.mxu0 0.0
    %1374 = vmatpush1.msra.mxu0 %v1319
    %1375 = vmatprep.subr.mxu0 0.0
    %1376 = vmatpush2.msra.mxu0 0.0
    %1377 = vmatprep.subr.mxu0 0.0
    %1378 = vmatpush2.msra.mxu0 0.0
    %1379 = vmatprep.subr.mxu0 0.0
    %1380 = vmatpush2.msra.mxu0 0.0
    %1381 = vmatprep.subr.mxu0 0.0
    %1382 = vmatpush2.msra.mxu0 0.0
    %1383 = vmatprep.subr.mxu0 0.0
    %1384 = vmatpush2.msra.mxu0 0.0
    %1385 = vmatprep.subr.mxu0 0.0
    %1386 = vmatpush2.msra.mxu0 0.0
    %1387 = vmatprep.subr.mxu0 0.0
    %1388 = vmatpush2.msra.mxu0 0.0
    %1389 = vmatprep.subr.mxu0 0.0
    %1390 = vmatpush2.msra.mxu0 0.0
    %1391 = vmatprep.subr.mxu0 0.0
    %1392 = vmatpush2.msra.mxu0 0.0
    %1393 = vmatprep.subr.mxu0 0.0
    %1394 = vmatpush2.msra.mxu0 0.0
    %1395 = vmatprep.subr.mxu0 0.0
    %1396 = vmatpush2.msra.mxu0 0.0
    %1397 = vmatprep.subr.mxu0 0.0
    %1398 = vmatpush2.msra.mxu0 0.0
    %1399 = vmatprep.subr.mxu0 0.0
    %1400 = vmatpush2.msra.mxu0 0.0
    %1401 = vmatprep.subr.mxu0 0.0
    %1402 = vmatpush2.msra.mxu0 0.0
    %1403 = vmatprep.subr.mxu0 0.0
    %1404 = vmatpush2.msra.mxu0 0.0
    %1405 = vmatprep.subr.mxu0 0.0
    %1406 = vmatpush2.msra.mxu0 0.0
    %1407 = vmatprep.mubr.f32.mxu0 0.0
    %1408 = vmatmul.mubr.f32.gmra.mxu0 %v1300
    %v1409 = vpop.f32.mrf.mxu0
    %v1410 = vadd.f32 %v1341, %v1409
    %v1411 = vpop.f32.mrf.mxu0
    %1412 = vmatprep.mubr.f32.mxu0 0.0
    %1413 = vmatmul.mubr.f32.gmra.mxu0 %v1305
    %v1414 = vpop.f32.mrf.mxu0
    %v1415 = vadd.f32 %v1341, %v1414
    %v1416 = vpop.f32.mrf.mxu0
    %1417 = vmatprep.mubr.f32.mxu0 0.0
    %1418 = vmatmul.mubr.f32.gmra.mxu0 %v1310
    %v1419 = vpop.f32.mrf.mxu0
    %v1420 = vadd.f32 %v1341, %v1419
    %v1421 = vpop.f32.mrf.mxu0
    %1422 = vmatprep.mubr.f32.mxu0 0.0
    %1423 = vmatmul.mubr.f32.gmra.mxu0 %v1315
    %v1424 = vpop.f32.mrf.mxu0
    %v1425 = vadd.f32 %v1341, %v1424
    %v1426 = vpop.f32.mrf.mxu0
    %1427 = vdwg.mxu0
    %v1428 = vadd.f32 %v1410, %v1415
    %v1429 = vadd.f32 %v1428, %v1420
    %v1430 = vadd.f32 %v1429, %v1425
    %v1431 = vrot.slane %v1430, 4
    %v1432 = vadd.f32 %v1430, %v1431
    %v1433 = vrot.slane %v1432, 2
    %v1434 = vadd.f32 %v1432, %v1433
    %v1435 = vrot.slane %v1434, 1
    %v1436 = vadd.f32 %v1434, %v1435
    %v1437 = vmul.f32 %v1436, %v674
    %v1438 = vsub.f32 %v1410, %v1437
    %v1439 = vsub.f32 %v1415, %v1437
    %v1440 = vsub.f32 %v1420, %v1437
    %v1441 = vsub.f32 %v1425, %v1437
    %v1442 = vmul.f32 %v1438, %v1438
    %v1443 = vmul.f32 %v1439, %v1439
    %v1444 = vmul.f32 %v1440, %v1440
    %v1445 = vmul.f32 %v1441, %v1441
    %v1446 = vadd.f32 %v1442, %v1443
    %v1447 = vadd.f32 %v1446, %v1444
    %v1448 = vadd.f32 %v1447, %v1445
    %v1449 = vrot.slane %v1448, 4
    %v1450 = vadd.f32 %v1448, %v1449
    %v1451 = vrot.slane %v1450, 2
    %v1452 = vadd.f32 %v1450, %v1451
    %v1453 = vrot.slane %v1452, 1
    %v1454 = vadd.f32 %v1452, %v1453
    %v1455 = vmul.f32 %v1454, %v674
    %v1456 = vadd.f32 %v1455, 1e-05
    %v1457 = vrsqrt.pop %v1456
    %v1458 = vmul.f32 %v1438, %v1457
    %v1459 = vmul.f32 %v1439, %v1457
    %v1460 = vmul.f32 %v1440, %v1457
    %v1461 = vmul.f32 %v1441, %v1457
    %v1462 = vmax.f32 %v1458, 0.0
    %v1463 = vmax.f32 %v1459, 0.0
    %v1464 = vmax.f32 %v1460, 0.0
    %v1465 = vmax.f32 %v1461, 0.0
    %s1466 = scalar_lea.vmem [#allocation6], 128
    %v1467 = vld [vmem:[%s1466] sm:$0xff]
    %v1468 = vld [vmem:[%s1466 + $0x8] sm:$0xff]
    %v1469 = vld [vmem:[%s1466 + $0x10] sm:$0xff]
    %v1470 = vld [vmem:[%s1466 + $0x18] sm:$0xff]
    %v1471 = vld [vmem:[%s1466 + $0x20] sm:$0xff]
    %v1472 = vld [vmem:[%s1466 + $0x28] sm:$0xff]
    %v1473 = vld [vmem:[%s1466 + $0x30] sm:$0xff]
    %v1474 = vld [vmem:[%s1466 + $0x38] sm:$0xff]
    %v1475 = vld [vmem:[%s1466 + $0x40] sm:$0xff]
    %v1476 = vld [vmem:[%s1466 + $0x48] sm:$0xff]
    %v1477 = vld [vmem:[%s1466 + $0x50] sm:$0xff]
    %v1478 = vld [vmem:[%s1466 + $0x58] sm:$0xff]
    %v1479 = vld [vmem:[%s1466 + $0x60] sm:$0xff]
    %v1480 = vld [vmem:[%s1466 + $0x68] sm:$0xff]
    %v1481 = vld [vmem:[%s1466 + $0x70] sm:$0xff]
    %v1482 = vld [vmem:[%s1466 + $0x78] sm:$0xff]
    %s1483 = scalar_lea.vmem %s9, 1
    %v1484 = vld [vmem:[%s1483] sm:$0x1]
    %v1486 = vlaneseq
    %v1487 = vshrl.u32 %v1486, 7
    %v1488 = vsub.s32 0, %v1487
    %v1489 = vrot.slane %v1484, %v1488
    %1491 = vmatprep.subr.mxu0 0.0
    %1492 = vmatpush1.msra.mxu0 %v1482
    %1493 = vmatprep.subr.mxu0 0.0
    %1494 = vmatpush1.msra.mxu0 %v1481
    %1495 = vmatprep.subr.mxu0 0.0
    %1496 = vmatpush1.msra.mxu0 %v1480
    %1497 = vmatprep.subr.mxu0 0.0
    %1498 = vmatpush1.msra.mxu0 %v1479
    %1499 = vmatprep.subr.mxu0 0.0
    %1500 = vmatpush1.msra.mxu0 %v1478
    %1501 = vmatprep.subr.mxu0 0.0
    %1502 = vmatpush1.msra.mxu0 %v1477
    %1503 = vmatprep.subr.mxu0 0.0
    %1504 = vmatpush1.msra.mxu0 %v1476
    %1505 = vmatprep.subr.mxu0 0.0
    %1506 = vmatpush1.msra.mxu0 %v1475
    %1507 = vmatprep.subr.mxu0 0.0
    %1508 = vmatpush1.msra.mxu0 %v1474
    %1509 = vmatprep.subr.mxu0 0.0
    %1510 = vmatpush1.msra.mxu0 %v1473
    %1511 = vmatprep.subr.mxu0 0.0
    %1512 = vmatpush1.msra.mxu0 %v1472
    %1513 = vmatprep.subr.mxu0 0.0
    %1514 = vmatpush1.msra.mxu0 %v1471
    %1515 = vmatprep.subr.mxu0 0.0
    %1516 = vmatpush1.msra.mxu0 %v1470
    %1517 = vmatprep.subr.mxu0 0.0
    %1518 = vmatpush1.msra.mxu0 %v1469
    %1519 = vmatprep.subr.mxu0 0.0
    %1520 = vmatpush1.msra.mxu0 %v1468
    %1521 = vmatprep.subr.mxu0 0.0
    %1522 = vmatpush1.msra.mxu0 %v1467
    %1523 = vmatprep.subr.mxu0 0.0
    %1524 = vmatpush2.msra.mxu0 0.0
    %1525 = vmatprep.subr.mxu0 0.0
    %1526 = vmatpush2.msra.mxu0 0.0
    %1527 = vmatprep.subr.mxu0 0.0
    %1528 = vmatpush2.msra.mxu0 0.0
    %1529 = vmatprep.subr.mxu0 0.0
    %1530 = vmatpush2.msra.mxu0 0.0
    %1531 = vmatprep.subr.mxu0 0.0
    %1532 = vmatpush2.msra.mxu0 0.0
    %1533 = vmatprep.subr.mxu0 0.0
    %1534 = vmatpush2.msra.mxu0 0.0
    %1535 = vmatprep.subr.mxu0 0.0
    %1536 = vmatpush2.msra.mxu0 0.0
    %1537 = vmatprep.subr.mxu0 0.0
    %1538 = vmatpush2.msra.mxu0 0.0
    %1539 = vmatprep.subr.mxu0 0.0
    %1540 = vmatpush2.msra.mxu0 0.0
    %1541 = vmatprep.subr.mxu0 0.0
    %1542 = vmatpush2.msra.mxu0 0.0
    %1543 = vmatprep.subr.mxu0 0.0
    %1544 = vmatpush2.msra.mxu0 0.0
    %1545 = vmatprep.subr.mxu0 0.0
    %1546 = vmatpush2.msra.mxu0 0.0
    %1547 = vmatprep.subr.mxu0 0.0
    %1548 = vmatpush2.msra.mxu0 0.0
    %1549 = vmatprep.subr.mxu0 0.0
    %1550 = vmatpush2.msra.mxu0 0.0
    %1551 = vmatprep.subr.mxu0 0.0
    %1552 = vmatpush2.msra.mxu0 0.0
    %1553 = vmatprep.subr.mxu0 0.0
    %1554 = vmatpush2.msra.mxu0 0.0
    %1555 = vmatprep.mubr.f32.mxu0 0.0
    %1556 = vmatmul.mubr.f32.gmra.mxu0 %v1462
    %v1557 = vpop.f32.mrf.mxu0
    %v1558 = vadd.f32 %v1489, %v1557
    %v1559 = vpop.f32.mrf.mxu0
    %1560 = vmatprep.mubr.f32.mxu0 0.0
    %1561 = vmatmul.mubr.f32.gmra.mxu0 %v1463
    %v1562 = vpop.f32.mrf.mxu0
    %v1563 = vadd.f32 %v1489, %v1562
    %v1564 = vpop.f32.mrf.mxu0
    %1565 = vmatprep.mubr.f32.mxu0 0.0
    %1566 = vmatmul.mubr.f32.gmra.mxu0 %v1464
    %v1567 = vpop.f32.mrf.mxu0
    %v1568 = vadd.f32 %v1489, %v1567
    %v1569 = vpop.f32.mrf.mxu0
    %1570 = vmatprep.mubr.f32.mxu0 0.0
    %1571 = vmatmul.mubr.f32.gmra.mxu0 %v1465
    %v1572 = vpop.f32.mrf.mxu0
    %v1573 = vadd.f32 %v1489, %v1572
    %v1574 = vpop.f32.mrf.mxu0
    %1575 = vdwg.mxu0
    %v1576 = vadd.f32 %v1558, %v1563
    %v1577 = vadd.f32 %v1576, %v1568
    %v1578 = vadd.f32 %v1577, %v1573
    %v1579 = vrot.slane %v1578, 4
    %v1580 = vadd.f32 %v1578, %v1579
    %v1581 = vrot.slane %v1580, 2
    %v1582 = vadd.f32 %v1580, %v1581
    %v1583 = vrot.slane %v1582, 1
    %v1584 = vadd.f32 %v1582, %v1583
    %v1585 = vmul.f32 %v1584, %v674
    %v1586 = vsub.f32 %v1558, %v1585
    %v1587 = vsub.f32 %v1563, %v1585
    %v1588 = vsub.f32 %v1568, %v1585
    %v1589 = vsub.f32 %v1573, %v1585
    %v1590 = vmul.f32 %v1586, %v1586
    %v1591 = vmul.f32 %v1587, %v1587
    %v1592 = vmul.f32 %v1588, %v1588
    %v1593 = vmul.f32 %v1589, %v1589
    %v1594 = vadd.f32 %v1590, %v1591
    %v1595 = vadd.f32 %v1594, %v1592
    %v1596 = vadd.f32 %v1595, %v1593
    %v1597 = vrot.slane %v1596, 4
    %v1598 = vadd.f32 %v1596, %v1597
    %v1599 = vrot.slane %v1598, 2
    %v1600 = vadd.f32 %v1598, %v1599
    %v1601 = vrot.slane %v1600, 1
    %v1602 = vadd.f32 %v1600, %v1601
    %v1603 = vmul.f32 %v1602, %v674
    %v1604 = vadd.f32 %v1603, 1e-05
    %v1605 = vrsqrt.pop %v1604
    %v1606 = vmul.f32 %v1586, %v1605
    %v1607 = vmul.f32 %v1587, %v1605
    %v1608 = vmul.f32 %v1588, %v1605
    %v1609 = vmul.f32 %v1589, %v1605
    %v1610 = vmax.f32 %v1606, 0.0
    %v1611 = vmax.f32 %v1607, 0.0
    %v1612 = vmax.f32 %v1608, 0.0
    %v1613 = vmax.f32 %v1609, 0.0
    %1614 = vst [vmem:[#allocation9] sm:$0xff] %v1610
    %1615 = vst [vmem:[#allocation9 + $0x8] sm:$0xff] %v1611
    %1616 = vst [vmem:[#allocation9 + $0x10] sm:$0xff] %v1612
    %1617 = vst [vmem:[#allocation9 + $0x18] sm:$0xff] %v1613
    %v1618 = vld [vmem:[%s2] sm:$0x3]
    %v1620 = vsel %vm405, %v1618, 0
    %1622 = vmatprep.subr.mxu0 0.0
    %1623 = vmatpush1.msra.mxu0 0.0
    %1624 = vmatprep.subr.mxu0 0.0
    %1625 = vmatpush1.msra.mxu0 0.0
    %1626 = vmatprep.subr.mxu0 0.0
    %1627 = vmatpush1.msra.mxu0 0.0
    %1628 = vmatprep.subr.mxu0 0.0
    %1629 = vmatpush1.msra.mxu0 0.0
    %1630 = vmatprep.subr.mxu0 0.0
    %1631 = vmatpush1.msra.mxu0 0.0
    %1632 = vmatprep.subr.mxu0 0.0
    %1633 = vmatpush1.msra.mxu0 0.0
    %1634 = vmatprep.subr.mxu0 0.0
    %1635 = vmatpush1.msra.mxu0 0.0
    %1636 = vmatprep.subr.mxu0 0.0
    %1637 = vmatpush1.msra.mxu0 0.0
    %1638 = vmatprep.subr.mxu0 0.0
    %1639 = vmatpush1.msra.mxu0 0.0
    %1640 = vmatprep.subr.mxu0 0.0
    %1641 = vmatpush1.msra.mxu0 0.0
    %1642 = vmatprep.subr.mxu0 0.0
    %1643 = vmatpush1.msra.mxu0 0.0
    %1644 = vmatprep.subr.mxu0 0.0
    %1645 = vmatpush1.msra.mxu0 0.0
    %1646 = vmatprep.subr.mxu0 0.0
    %1647 = vmatpush1.msra.mxu0 %v1613
    %1648 = vmatprep.subr.mxu0 0.0
    %1649 = vmatpush1.msra.mxu0 %v1612
    %1650 = vmatprep.subr.mxu0 0.0
    %1651 = vmatpush1.msra.mxu0 %v1611
    %1652 = vmatprep.subr.mxu0 0.0
    %1653 = vmatpush1.msra.mxu0 %v1610
    %1654 = vmatprep.subr.mxu0 0.0
    %1655 = vmatpush2.msra.mxu0 0.0
    %1656 = vmatprep.subr.mxu0 0.0
    %1657 = vmatpush2.msra.mxu0 0.0
    %1658 = vmatprep.subr.mxu0 0.0
    %1659 = vmatpush2.msra.mxu0 0.0
    %1660 = vmatprep.subr.mxu0 0.0
    %1661 = vmatpush2.msra.mxu0 0.0
    %1662 = vmatprep.subr.mxu0 0.0
    %1663 = vmatpush2.msra.mxu0 0.0
    %1664 = vmatprep.subr.mxu0 0.0
    %1665 = vmatpush2.msra.mxu0 0.0
    %1666 = vmatprep.subr.mxu0 0.0
    %1667 = vmatpush2.msra.mxu0 0.0
    %1668 = vmatprep.subr.mxu0 0.0
    %1669 = vmatpush2.msra.mxu0 0.0
    %1670 = vmatprep.subr.mxu0 0.0
    %1671 = vmatpush2.msra.mxu0 0.0
    %1672 = vmatprep.subr.mxu0 0.0
    %1673 = vmatpush2.msra.mxu0 0.0
    %1674 = vmatprep.subr.mxu0 0.0
    %1675 = vmatpush2.msra.mxu0 0.0
    %1676 = vmatprep.subr.mxu0 0.0
    %1677 = vmatpush2.msra.mxu0 0.0
    %1678 = vmatprep.subr.mxu0 0.0
    %1679 = vmatpush2.msra.mxu0 0.0
    %1680 = vmatprep.subr.mxu0 0.0
    %1681 = vmatpush2.msra.mxu0 0.0
    %1682 = vmatprep.subr.mxu0 0.0
    %1683 = vmatpush2.msra.mxu0 0.0
    %1684 = vmatprep.subr.mxu0 0.0
    %1685 = vmatpush2.msra.mxu0 0.0
    %1686 = vmatprep.mubr.f32.mxu0 0.0
    %1687 = vmatmul.mubr.f32.gmra.mxu0 %v1620
    %v1688 = vpop.f32.mrf.mxu0
    %v1689 = vadd.f32 0.0, %v1688
    %v1690 = vpop.f32.mrf.mxu0
    %1691 = vdwg.mxu0
    %1692 = vst [vmem:[#allocation10] sm:$0x3] %v1689
    // Predicated region
    $region58: #{graphcnn_forward.1} parent=1 // pred_check
      _
    $region59: #{graphcnn_forward.1} parent=1 // pred_check_branch
      %1694 = sbr.rel (0) target = $region61
    $region60: #{graphcnn_forward.1} parent=1 // pred_region
      %s1696 = ssub.s32 512, 512
      %1697 = vsyncadd [#allocation4], %s1696
      %s1698 = sshll.u32 [#allocation9], 4
      %s1699 = int_to_ptr.vmem [resolvable:$true] %s1698
      %1704 = dma.vmem_to_hbm [thread:$0]  %s1699, 512, %s11, [#allocation4], 128, 128, 8
    $region61: #{graphcnn_forward.1} parent=1 // pred_fallthru
      _
    // Predicated region
    $region62: #{graphcnn_forward.1} parent=1 // pred_check
      _
    $region63: #{graphcnn_forward.1} parent=1 // pred_check_branch
      %1706 = sbr.rel (0) target = $region65
    $region64: #{graphcnn_forward.1} parent=1 // pred_region
      %s1708 = ssub.s32 32, 32
      %1709 = vsyncadd [#allocation11], %s1708
      %s1711 = sshll.u32 [#allocation10], 4
      %s1712 = int_to_ptr.vmem [resolvable:$true] %s1711
      %1714 = dma.vmem_to_hbm [thread:$0]  %s1712, 32, %s12, [#allocation11]
    $region65: #{graphcnn_forward.1} parent=1 // pred_fallthru
      _
    // Predicated region
    $region66: #{graphcnn_forward.1} parent=1 // pred_check
      _
    $region67: #{graphcnn_forward.1} parent=1 // pred_check_branch
      %1716 = sbr.rel (0) target = $region69
    $region68: #{graphcnn_forward.1} parent=1 // pred_region
      %1717 = dma.done [#allocation4], 512
    $region69: #{graphcnn_forward.1} parent=1 // pred_fallthru
      _
    // Predicated region
    $region70: #{graphcnn_forward.1} parent=1 // pred_check
      _
    $region71: #{graphcnn_forward.1} parent=1 // pred_check_branch
      %1719 = sbr.rel (0) target = $region73
    $region72: #{graphcnn_forward.1} parent=1 // pred_region
      %1720 = dma.done [#allocation11], 32
    $region73: #{graphcnn_forward.1} parent=1 // pred_fallthru
      _
    %1721 = vsyncpa [#allocation3], 1
    %1722 = vsyncpa [#allocation7], 1
    %1723 = vsyncpa [#allocation4], 1
    %1724 = vsyncpa [#allocation11], 1
    %1725 = vsyncpa [#allocation5], 1

</llo_original>
